<compile_context>
chip_gen: v7x
topology: tpu7x:2x2x1
jax: 0.10.0
libtpu: 0.0.40
codegen_flags: <defaults>
</compile_context>

<pallas_src>
import functools
import math

import jax
import jax.numpy as jnp
from jax.experimental import pallas as pl
from jax.experimental.pallas import tpu as pltpu


def _default_vmem_limit():
    # Per-generation scoped-VMEM budget: 48 MiB on v7x (64 MiB physical), 64 MiB on
    # v5e/v6e (128 MiB physical).
    try:
        cap = int(pltpu.get_tpu_info().vmem_capacity_bytes)
    except Exception:
        cap = 128 * 1024 * 1024
    return int(min(cap - 16 * 1024 * 1024, 64 * 1024 * 1024))


_VMEM_LIMIT = _default_vmem_limit()


# ----------------------------- Pallas kernels ------------------------------

def _accum_row(x_ref, w_ref, acc_ref, ki, *, kw, ho, wo):
    """Accumulate the kw taps of kernel row `ki` as per-tap MXU matmuls.

    x_ref : (1, Hp, Wp, Cin) bf16 padded input block
    w_ref : (1, kw, Cin, tn) bf16 weight slice for this kernel row
    acc   : (ho*wo, tn) f32 accumulator
    """
    cin = x_ref.shape[3]
    for kj in range(kw):
        tap = x_ref[0, pl.ds(ki, ho), pl.ds(kj, wo), :].reshape(ho * wo, cin)
        acc_ref[...] += jnp.dot(tap.astype(jnp.bfloat16), w_ref[0, kj],
                                preferred_element_type=jnp.float32)


def _conv_kernel(x_ref, w_ref, b_ref, *rest, kh, kw, ho, wo, has_res, emit_pad):
    """One grid step = one kernel-row tap (ki) for one (batch, Cout-tile).

    rest = [r_ref (1, ho*wo, tn)], o_ref, acc_ref (ho*wo, tn) f32.
    If emit_pad > 0 the output block is (1, ho+2p, wo+2p, tn) and the kernel writes a
    pre-padded image (zero rim + interior), so the consumer 3x3 conv needs no wrapper
    jnp.pad HBM round trip.
    """
    if has_res:
        r_ref, o_ref, acc_ref = rest
    else:
        o_ref, acc_ref = rest
    ki = pl.program_id(2)

    @pl.when(ki == 0)
    def _():
        acc_ref[...] = jnp.zeros_like(acc_ref)

    _accum_row(x_ref, w_ref, acc_ref, ki, kw=kw, ho=ho, wo=wo)

    @pl.when(ki == kh - 1)
    def _():
        y = acc_ref[...] + b_ref[...]
        if has_res:
            y = y + r_ref[0].astype(jnp.float32)
        y = y.astype(o_ref.dtype)
        tn = y.shape[-1]
        if emit_pad:
            o_ref[0] = jnp.zeros(o_ref.shape[1:], o_ref.dtype)
            o_ref[0, pl.ds(emit_pad, ho), pl.ds(emit_pad, wo), :] = y.reshape(ho, wo, tn)
        else:
            o_ref[0] = y


def _conv_sample_kernel(x_ref, w_ref, b_ref, nz_ref, z_ref, std_ref, lv_ref, acc_ref,
                        *, kh, kw, ho, wo):
    """conv13 fused with channel split + clamp + reparameterization (one batch elem)."""
    ki = pl.program_id(1)

    @pl.when(ki == 0)
    def _():
        acc_ref[...] = jnp.zeros_like(acc_ref)

    _accum_row(x_ref, w_ref, acc_ref, ki, kw=kw, ho=ho, wo=wo)

    @pl.when(ki == kh - 1)
    def _():
        y = acc_ref[...] + b_ref[...]                       # (hw, 64) f32
        c2 = y.shape[-1] // 2
        mean = y[:, :c2]
        lv = jnp.clip(y[:, c2:], -30.0, 20.0)
        std = jnp.exp(0.5 * lv)
        # TODO(synk): 32-lane stores are lane-sparse; acceptable for the tiny latent.
        z_ref[0] = mean + std * nz_ref[0]
        std_ref[0] = std
        lv_ref[0] = lv


def _groupnorm_kernel(x_ref, g_ref, b_ref, m_ref, mt_ref, o_ref,
                      *, eps, act, slope, count, h, w, pad):
    """GroupNorm(+activation) on one (1, HW, C) channels-last block.

    Group statistics via a lane-dense (C, G) mask matmul; single-pass variance with a
    >=0 clamp; apply phase uses precomputed scale/shift.  If pad>0 the output block is
    (1, H+2p, W+2p, C) written pre-padded for the consumer 3x3 conv.
    """
    x = x_ref[0].astype(jnp.float32)                                     # (HW, C)
    cs = jnp.sum(x, axis=0, keepdims=True)                               # (1, C)
    css = jnp.sum(x * x, axis=0, keepdims=True)                          # (1, C)
    sg = jnp.dot(cs, m_ref[...], preferred_element_type=jnp.float32)     # (1, G)
    sg2 = jnp.dot(css, m_ref[...], preferred_element_type=jnp.float32)   # (1, G)
    inv = 1.0 / count
    mean_g = sg * inv
    var_g = jnp.maximum(sg2 * inv - mean_g * mean_g, 0.0)
    rstd_g = jax.lax.rsqrt(var_g + eps)
    mean_c = jnp.dot(mean_g, mt_ref[...], preferred_element_type=jnp.float32)   # (1, C)
    rstd_c = jnp.dot(rstd_g, mt_ref[...], preferred_element_type=jnp.float32)   # (1, C)
    scale_c = rstd_c * g_ref[...]
    shift_c = b_ref[...] - mean_c * scale_c
    y = x * scale_c + shift_c
    if act == "silu":
        y = y * jax.nn.sigmoid(y)
    elif act == "leaky_relu":
        y = jnp.where(y >= 0, y, slope * y)
    y = y.astype(o_ref.dtype)
    if pad:
        c = y.shape[-1]
        o_ref[0] = jnp.zeros(o_ref.shape[1:], o_ref.dtype)
        o_ref[0, pl.ds(pad, h), pl.ds(pad, w), :] = y.reshape(h, w, c)
    else:
        o_ref[0] = y


def _attention_kernel(x_ref, wi_ref, bi_ref, wo_ref, bo_ref, r_ref, o_ref):
    """Single-head self-attention over HW tokens for one batch element (+residual).

    The 1/sqrt(C) scale is folded into the Q columns of wi/bi at prep time.
    """
    c = x_ref.shape[2]
    x = x_ref[0]                                                          # (s, c) bf16
    qkv = jnp.dot(x, wi_ref[...], preferred_element_type=jnp.float32) + bi_ref[...]
    q = qkv[:, :c].astype(jnp.bfloat16)
    k = qkv[:, c:2 * c].astype(jnp.bfloat16)
    v = qkv[:, 2 * c:].astype(jnp.bfloat16)
    sc = jax.lax.dot_general(q, k, (((1,), (1,)), ((), ())),
                             preferred_element_type=jnp.float32)          # (s, s)
    m = jnp.max(sc, axis=-1, keepdims=True)
    p = jnp.exp(sc - m)
    l = jnp.sum(p, axis=-1, keepdims=True)
    o = jnp.dot(p.astype(jnp.bfloat16), v, preferred_element_type=jnp.float32)
    o = o * pl.reciprocal(l, approx=True)
    out = (jnp.dot(o.astype(jnp.bfloat16), wo_ref[...],
                   preferred_element_type=jnp.float32) + bo_ref[...])
    o_ref[0] = (out + r_ref[0].astype(jnp.float32)).astype(o_ref.dtype)


# ------------------------------ kernel wrappers -----------------------------

def conv2d(x, cp, res=None, pre_padded=False, emit_pad=0):
    """Conv2d (PyTorch semantics) via the gridded Pallas conv kernel.

    x   : (N, H, W, Cin) bf16 NHWC (already padded if pre_padded=True)
    cp  : prepared conv params (see _prep_conv)
    res : optional (N, Ho, Wo, Cout) residual added in the kernel epilogue
    emit_pad : write a (Ho+2p, Wo+2p) pre-padded output for the next 3x3 conv
    """
    n, h, w, c = x.shape
    kh, kw = cp["kh"], cp["kw"]

    if cp["stride"] == 2:
        # TODO(synk): fuse F.pad(0,1,0,1) + space-to-depth into the producing kernel.
        ph = 1 + (h + 1) % 2
        pw = 1 + (w + 1) % 2
        x = jnp.pad(x, ((0, 0), (0, ph), (0, pw), (0, 0)))
        hp2, wp2 = x.shape[1], x.shape[2]
        x = (x.reshape(n, hp2 // 2, 2, wp2 // 2, 2, c)
               .transpose(0, 1, 3, 2, 4, 5)
               .reshape(n, hp2 // 2, wp2 // 2, 4 * c))
    else:
        pad = cp["pad"]
        if pad and not pre_padded:
            x = jnp.pad(x, ((0, 0), (pad, pad), (pad, pad), (0, 0)))
        cin_w = cp["w"].shape[2]
        if x.shape[-1] < cin_w:                              # first conv: Cin 1 -> 8
            x = jnp.pad(x, ((0, 0), (0, 0), (0, 0), (0, cin_w - x.shape[-1])))

    n, hp, wp, cin = x.shape
    cout = cp["w"].shape[-1]
    ho, wo = hp - kh + 1, wp - kw + 1
    hw = ho * wo
    tn = min(cout, 256)                 # matches the 2x256 MXU on v6e/v7x
    n_ct = cout // tn

    in_specs = [
        pl.BlockSpec((1, hp, wp, cin), lambda b, j, k: (b, 0, 0, 0)),
        pl.BlockSpec((1, kw, cin, tn), lambda b, j, k: (k, 0, 0, j)),
        pl.BlockSpec((1, tn), lambda b, j, k: (0, j)),
    ]
    args = [x, cp["w"], cp["b"]]
    if res is not None:
        in_specs.append(pl.BlockSpec((1, hw, tn), lambda b, j, k: (b, 0, j)))
        args.append(res.reshape(n, hw, cout))

    if emit_pad:
        hpo, wpo = ho + 2 * emit_pad, wo + 2 * emit_pad
        out_shape = jax.ShapeDtypeStruct((n, hpo, wpo, cout), jnp.bfloat16)
        out_spec = pl.BlockSpec((1, hpo, wpo, tn), lambda b, j, k: (b, 0, 0, j))
    else:
        out_shape = jax.ShapeDtypeStruct((n, hw, cout), jnp.bfloat16)
        out_spec = pl.BlockSpec((1, hw, tn), lambda b, j, k: (b, 0, j))

    kernel = functools.partial(_conv_kernel, kh=kh, kw=kw, ho=ho, wo=wo,
                               has_res=res is not None, emit_pad=emit_pad)
    out = pl.pallas_call(
        kernel,
        out_shape=out_shape,
        grid=(n, n_ct, kh),
        in_specs=in_specs,
        out_specs=out_spec,
        scratch_shapes=[pltpu.VMEM((hw, tn), jnp.float32)],
        compiler_params=pltpu.CompilerParams(
            dimension_semantics=("parallel", "parallel", "arbitrary"),
            vmem_limit_bytes=_VMEM_LIMIT),
    )(*args)
    return out if emit_pad else out.reshape(n, ho, wo, cout)


def conv2d_sample(x, cp, noise):
    """conv13 + chunk + clamp + reparameterize, fused (x must be pre-padded bf16)."""
    n, hp, wp, cin = x.shape
    kh, kw = cp["kh"], cp["kw"]
    cout = cp["w"].shape[-1]
    ho, wo = hp - kh + 1, wp - kw + 1
    hw = ho * wo
    ch = cout // 2
    kernel = functools.partial(_conv_sample_kernel, kh=kh, kw=kw, ho=ho, wo=wo)
    z, std, lv = pl.pallas_call(
        kernel,
        out_shape=(jax.ShapeDtypeStruct((n, hw, ch), jnp.float32),) * 3,
        grid=(n, kh),
        in_specs=[pl.BlockSpec((1, hp, wp, cin), lambda b, k: (b, 0, 0, 0)),
                  pl.BlockSpec((1, kw, cin, cout), lambda b, k: (k, 0, 0, 0)),
                  pl.BlockSpec((1, cout), lambda b, k: (0, 0)),
                  pl.BlockSpec((1, hw, ch), lambda b, k: (b, 0, 0))],
        out_specs=(pl.BlockSpec((1, hw, ch), lambda b, k: (b, 0, 0)),) * 3,
        scratch_shapes=[pltpu.VMEM((hw, cout), jnp.float32)],
        compiler_params=pltpu.CompilerParams(
            dimension_semantics=("parallel", "arbitrary"),
            vmem_limit_bytes=_VMEM_LIMIT),
    )(x, cp["w"], cp["b"], noise)
    return z, std, lv, ho, wo, ch


def group_norm(x, gp, act=None, pad=0, eps=1e-5, slope=0.3):
    """GroupNorm(32) (+ fused activation), channels-last; optional pre-padded output."""
    n, h, w, c = x.shape
    hw = h * w
    g = gp["mask"].shape[1]
    x3 = x.reshape(n, hw, c)
    if pad:
        hp, wp = h + 2 * pad, w + 2 * pad
        out_shape = jax.ShapeDtypeStruct((n, hp, wp, c), jnp.bfloat16)
        out_spec = pl.BlockSpec((1, hp, wp, c), lambda b: (b, 0, 0, 0))
    else:
        out_shape = jax.ShapeDtypeStruct((n, hw, c), jnp.bfloat16)
        out_spec = pl.BlockSpec((1, hw, c), lambda b: (b, 0, 0))
    kernel = functools.partial(_groupnorm_kernel, eps=eps, act=act, slope=slope,
                               count=float(hw * (c // g)), h=h, w=w, pad=pad)
    y = pl.pallas_call(
        kernel,
        out_shape=out_shape,
        grid=(n,),
        in_specs=[pl.BlockSpec((1, hw, c), lambda b: (b, 0, 0)),
                  pl.BlockSpec((1, c), lambda b: (0, 0)),
                  pl.BlockSpec((1, c), lambda b: (0, 0)),
                  pl.BlockSpec((c, g), lambda b: (0, 0)),
                  pl.BlockSpec((g, c), lambda b: (0, 0))],
        out_specs=out_spec,
        compiler_params=pltpu.CompilerParams(
            dimension_semantics=("parallel",),
            vmem_limit_bytes=_VMEM_LIMIT),
    )(x3, gp["g"], gp["b"], gp["mask"], gp["maskT"])
    return y if pad else y.reshape(n, h, w, c)


def residual_block(x, rp):
    """VAE_ResidualBlock: GN->SiLU->Conv3x3 -> GN->SiLU->Conv3x3 (+ optional 1x1 skip).

    Each GroupNorm emits a pre-padded output so the 3x3 convs need no wrapper pad.
    """
    h = group_norm(x, rp["gn1"], act="silu", pad=1)
    h = conv2d(h, rp["c1"], pre_padded=True)
    h = group_norm(h, rp["gn2"], act="silu", pad=1)
    skip = conv2d(x, rp["res"]) if "res" in rp else x
    return conv2d(h, rp["c2"], res=skip, pre_padded=True)


def attention_block(x, ap):
    """VAE_AttentionBlock: GN -> 1-head self-attention over HW tokens -> +residual."""
    n, h, w, c = x.shape
    s = h * w
    g = group_norm(x, ap["gn"], act=None)
    x_tok = g.reshape(n, s, c)
    r_tok = x.reshape(n, s, c)
    out = pl.pallas_call(
        _attention_kernel,
        out_shape=jax.ShapeDtypeStruct((n, s, c), jnp.bfloat16),
        grid=(n,),
        in_specs=[pl.BlockSpec((1, s, c), lambda b: (b, 0, 0)),
                  pl.BlockSpec((c, 3 * c), lambda b: (0, 0)),
                  pl.BlockSpec((1, 3 * c), lambda b: (0, 0)),
                  pl.BlockSpec((c, c), lambda b: (0, 0)),
                  pl.BlockSpec((1, c), lambda b: (0, 0)),
                  pl.BlockSpec((1, s, c), lambda b: (b, 0, 0))],
        out_specs=pl.BlockSpec((1, s, c), lambda b: (b, 0, 0)),
        compiler_params=pltpu.CompilerParams(
            dimension_semantics=("parallel",),
            vmem_limit_bytes=_VMEM_LIMIT),
    )(x_tok, ap["wi"], ap["bi"], ap["wo"], ap["bo"], r_tok)
    return out.reshape(n, h, w, c)


# --------------------------- parameter preparation --------------------------
# All constant weight transposes / reshapes / bf16 casts are hoisted here (done once).

def _prep_conv(w_pt, b, stride, pad):
    cout, cin, kh, kw = w_pt.shape
    w = jnp.transpose(w_pt, (2, 3, 1, 0)).astype(jnp.float32)        # (kh, kw, cin, cout)
    if stride == 1:
        if cin < 8:                                                   # first conv: Cin=1
            w = jnp.pad(w, ((0, 0), (0, 0), (0, 8 - cin), (0, 0)))
        wk = w                                                        # (kh, kw, cin, cout)
    else:
        # stride-2 3x3 conv -> stride-1 2x2 conv over space-to-depth (4*cin) channels.
        w_ext = jnp.pad(w, ((0, 1), (0, 1), (0, 0), (0, 0)))          # (4, 4, cin, cout)
        w_r = (w_ext.reshape(2, 2, 2, 2, cin, cout)                   # (p, a, q, b, cin, cout)
                    .transpose(0, 2, 1, 3, 4, 5))                     # (p, q, a, b, cin, cout)
        wk = w_r.reshape(2, 2, 4 * cin, cout)                         # (kh=2, kw=2, 4cin, cout)
        kh, kw = 2, 2
    return {"w": wk.astype(jnp.bfloat16),
            "b": b.reshape(1, cout).astype(jnp.float32),
            "kh": kh, "kw": kw, "stride": stride, "pad": pad}


def _prep_gn(gamma, beta, num_groups=32):
    c = gamma.shape[0]
    ids = jnp.arange(c, dtype=jnp.int32) // (c // num_groups)
    mask = (ids[:, None] == jnp.arange(num_groups, dtype=jnp.int32)[None, :]
            ).astype(jnp.float32)                                     # (C, G)
    return {"g": gamma.reshape(1, c).astype(jnp.float32),
            "b": beta.reshape(1, c).astype(jnp.float32),
            "mask": mask, "maskT": mask.T}


def _prep_res(d):
    out = {"gn1": _prep_gn(d["gn1_g"], d["gn1_b"]),
           "c1": _prep_conv(d["c1_w"], d["c1_b"], 1, 1),
           "gn2": _prep_gn(d["gn2_g"], d["gn2_b"]),
           "c2": _prep_conv(d["c2_w"], d["c2_b"], 1, 1)}
    if "res_w" in d:
        out["res"] = _prep_conv(d["res_w"], d["res_b"], 1, 0)
    return out


def _prep_attn(d):
    c = d["wo"].shape[0]
    scale = 1.0 / math.sqrt(c)
    wi = d["wi"].astype(jnp.float32).at[:, :c].multiply(scale)   # fold 1/sqrt(C) into Q
    bi = d["bi"].astype(jnp.float32).at[:c].multiply(scale)
    return {"gn": _prep_gn(d["gn_g"], d["gn_b"]),
            "wi": wi.astype(jnp.bfloat16),
            "bi": bi.reshape(1, 3 * c).astype(jnp.float32),
            "wo": d["wo"].astype(jnp.bfloat16),
            "bo": d["bo"].reshape(1, c).astype(jnp.float32)}


def prepare_params(p):
    return {
        "conv0": _prep_conv(p["conv0_w"], p["conv0_b"], 1, 1),
        "res1": _prep_res(p["res1"]),
        "conv2": _prep_conv(p["conv2_w"], p["conv2_b"], 2, 0),
        "res3": _prep_res(p["res3"]),
        "conv4": _prep_conv(p["conv4_w"], p["conv4_b"], 2, 0),
        "res5": _prep_res(p["res5"]),
        "conv6": _prep_conv(p["conv6_w"], p["conv6_b"], 2, 0),
        "res7": _prep_res(p["res7"]),
        "attn8": _prep_attn(p["attn8"]),
        "res9": _prep_res(p["res9"]),
        "gn10": _prep_gn(p["gn10_g"], p["gn10_b"]),
        "conv12": _prep_conv(p["conv12_w"], p["conv12_b"], 1, 1),
        "conv13": _prep_conv(p["conv13_w"], p["conv13_b"], 1, 1),
    }


# ------------------------------ parameter init ------------------------------

def _init_conv(key, cout, cin, k):
    kw_, kb = jax.random.split(key)
    fan_in = cin * k * k
    w = jax.random.normal(kw_, (cout, cin, k, k), jnp.float32) / math.sqrt(fan_in)
    b = jax.random.normal(kb, (cout,), jnp.float32) * 0.01
    return w, b


def _init_gn(c):
    return jnp.ones((c,), jnp.float32), jnp.zeros((c,), jnp.float32)


def _init_linear(key, din, dout):
    kw_, kb = jax.random.split(key)
    w = jax.random.normal(kw_, (din, dout), jnp.float32) / math.sqrt(din)   # = W_pt.T
    b = jax.random.normal(kb, (dout,), jnp.float32) * 0.01
    return w, b


def _init_resblock(key, cin, cout):
    k1, k2, k3 = jax.random.split(key, 3)
    d = {}
    d["gn1_g"], d["gn1_b"] = _init_gn(cin)
    d["c1_w"], d["c1_b"] = _init_conv(k1, cout, cin, 3)
    d["gn2_g"], d["gn2_b"] = _init_gn(cout)
    d["c2_w"], d["c2_b"] = _init_conv(k2, cout, cout, 3)
    if cin != cout:
        d["res_w"], d["res_b"] = _init_conv(k3, cout, cin, 1)
    return d


def _init_attn(key, c):
    k1, k2 = jax.random.split(key)
    d = {}
    d["gn_g"], d["gn_b"] = _init_gn(c)
    d["wi"], d["bi"] = _init_linear(k1, c, 3 * c)
    d["wo"], d["bo"] = _init_linear(k2, c, c)
    return d


def init_params(key):
    ks = iter(jax.random.split(key, 16))
    p = {}
    p["conv0_w"], p["conv0_b"] = _init_conv(next(ks), 128, 1, 3)
    p["res1"] = _init_resblock(next(ks), 128, 128)
    p["conv2_w"], p["conv2_b"] = _init_conv(next(ks), 128, 128, 3)
    p["res3"] = _init_resblock(next(ks), 128, 256)
    p["conv4_w"], p["conv4_b"] = _init_conv(next(ks), 256, 256, 3)
    p["res5"] = _init_resblock(next(ks), 256, 512)
    p["conv6_w"], p["conv6_b"] = _init_conv(next(ks), 512, 512, 3)
    p["res7"] = _init_resblock(next(ks), 512, 512)
    p["attn8"] = _init_attn(next(ks), 512)
    p["res9"] = _init_resblock(next(ks), 512, 512)
    p["gn10_g"], p["gn10_b"] = _init_gn(512)
    p["conv12_w"], p["conv12_b"] = _init_conv(next(ks), 64, 512, 3)
    p["conv13_w"], p["conv13_b"] = _init_conv(next(ks), 64, 64, 3)
    return p


# ------------------------------- full forward -------------------------------

def vae_encoder(x_nchw, p, noise_key):
    # Activations are carried in bf16 between kernels; all accumulation is f32.
    x = jnp.transpose(x_nchw, (0, 2, 3, 1)).astype(jnp.bfloat16)   # NCHW -> NHWC
    feats = []

    x = conv2d(x, p["conv0"])                                   # Conv2d(1, 128)
    x = residual_block(x, p["res1"])                            # Res(128, 128)

    x = conv2d(x, p["conv2"]); feats.append(x)                  # Conv2d s2 (128)
    x = residual_block(x, p["res3"])                            # Res(128, 256)

    x = conv2d(x, p["conv4"]); feats.append(x)                  # Conv2d s2 (256)
    x = residual_block(x, p["res5"])                            # Res(256, 512)

    x = conv2d(x, p["conv6"]); feats.append(x)                  # Conv2d s2 (512)
    x = residual_block(x, p["res7"])                            # Res(512, 512)
    x = attention_block(x, p["attn8"])                          # Attention(512)
    x = residual_block(x, p["res9"])                            # Res(512, 512)

    # GroupNorm(32, 512) + LeakyReLU(0.3), fused; output pre-padded for conv12.
    x = group_norm(x, p["gn10"], act="leaky_relu", slope=0.3, pad=1)

    # Conv2d(512, 64), output pre-padded for conv13.
    x = conv2d(x, p["conv12"], pre_padded=True, emit_pad=1)

    # Conv2d(64, 64) fused with chunk + clamp + exp/sqrt + reparameterization.
    n, hp, wp, _ = x.shape
    ch = p["conv13"]["w"].shape[-1] // 2
    noise = jax.random.normal(noise_key, (n, (hp - 2) * (wp - 2), ch), jnp.float32)
    z, stdev, logvar, h, w, ch = conv2d_sample(x, p["conv13"], noise)

    def to_nchw(t):
        return jnp.transpose(t.reshape(n, h, w, ch), (0, 3, 1, 2)).astype(jnp.float32)

    feats = [jnp.transpose(f, (0, 3, 1, 2)).astype(jnp.float32) for f in feats]
    return to_nchw(z), to_nchw(stdev), to_nchw(logvar), feats


if __name__ == "__main__":
    key = jax.random.PRNGKey(0)
    pkey, xkey, nkey = jax.random.split(key, 3)
    params = prepare_params(init_params(pkey))
    x = jax.random.normal(xkey, (2, 1, 16, 16), jnp.float32)    # NCHW, 1 input channel

    z, stdev, log_variance, feats = vae_encoder(x, params, nkey)
    jax.block_until_ready((z, stdev, log_variance, feats))

    assert z.shape == (2, 32, 2, 2)
    assert stdev.shape == (2, 32, 2, 2)
    assert log_variance.shape == (2, 32, 2, 2)
    assert [tuple(f.shape) for f in feats] == [(2, 128, 8, 8), (2, 256, 4, 4), (2, 512, 2, 2)]
    assert bool(jnp.all(jnp.isfinite(z)))
    assert bool(jnp.all(jnp.isfinite(stdev)))
    print("KERNEL_OK")
</pallas_src>

<mosaic_0001>
module attributes {stable_mosaic.version = 11 : i64} {
  func.func @_conv_kernel(%arg0: i32, %arg1: i32, %arg2: i32, %arg3: memref<1x18x18x8xbf16, #tpu.memory_space<vmem>>, %arg4: memref<1x3x8x128xbf16, #tpu.memory_space<vmem>>, %arg5: memref<1x128xf32, #tpu.memory_space<vmem>>, %arg6: memref<1x256x128xbf16, #tpu.memory_space<vmem>>, %arg7: memref<256x128xf32, #tpu.memory_space<vmem>>) attributes {dimension_semantics = [#tpu.dimension_semantics<parallel>, #tpu.dimension_semantics<parallel>, #tpu.dimension_semantics<arbitrary>], iteration_bounds = array<i64: 2, 1, 3>, scalar_prefetch = 0 : i64, scratch_operands = 1 : i64, tpu.core_type = #tpu.core_type<tc>, window_params = [{transform_indices = @transform_0, window_bounds = array<i64: 1, 18, 18, 8>}, {transform_indices = @transform_1, window_bounds = array<i64: 1, 3, 8, 128>}, {transform_indices = @transform_2, window_bounds = array<i64: 1, 128>}, {transform_indices = @transform_3, window_bounds = array<i64: 1, 256, 128>}]} {
    %c0_i32 = arith.constant 0 : i32
    %0 = arith.cmpi eq, %arg2, %c0_i32 : i32
    %1 = arith.extui %0 : i1 to i32
    %c0_i32_0 = arith.constant 0 : i32
    %2 = arith.cmpi ne, %1, %c0_i32_0 : i32
    scf.if %2 {
      %cst_34 = arith.constant 0.000000e+00 : f32
      %36 = vector.broadcast %cst_34 : f32 to vector<256x128xf32>
      %c0_35 = arith.constant 0 : index
      %c0_36 = arith.constant 0 : index
      %37 = vector.load %arg7[%c0_35, %c0_36] : memref<256x128xf32, #tpu.memory_space<vmem>>, vector<256x128xf32>
      tpu.vector_store %arg7[%c0_35, %c0_36], %36 {strides = array<i32>} : memref<256x128xf32, #tpu.memory_space<vmem>>, vector<256x128xf32>,
    } else {
    }
    %c0 = arith.constant 0 : index
    %3 = arith.index_cast %arg2 : i32 to index
    %c0_1 = arith.constant 0 : index
    %c0_2 = arith.constant 0 : index
    %4 = vector.load %arg3[%c0, %3, %c0_1, %c0_2] : memref<1x18x18x8xbf16, #tpu.memory_space<vmem>>, vector<1x16x16x8xbf16>
    %5 = vector.shape_cast %4 : vector<1x16x16x8xbf16> to vector<16x16x8xbf16>
    %6 = vector.shape_cast %5 : vector<16x16x8xbf16> to vector<256x8xbf16>
    %c0_3 = arith.constant 0 : index
    %c0_4 = arith.constant 0 : index
    %7 = vector.load %arg7[%c0_3, %c0_4] : memref<256x128xf32, #tpu.memory_space<vmem>>, vector<256x128xf32>
    %c0_5 = arith.constant 0 : index
    %c0_6 = arith.constant 0 : index
    %c0_7 = arith.constant 0 : index
    %c0_8 = arith.constant 0 : index
    %8 = vector.load %arg4[%c0_5, %c0_6, %c0_7, %c0_8] : memref<1x3x8x128xbf16, #tpu.memory_space<vmem>>, vector<1x1x8x128xbf16>
    %9 = vector.shape_cast %8 : vector<1x1x8x128xbf16> to vector<8x128xbf16>
    %cst = arith.constant dense<0.000000e+00> : vector<256x128xf32>
    %10 = tpu.matmul %6, %9, %cst {dimension_numbers = #tpu.dot_dimension_numbers<[1], [0], [0], [1], [0, 0, 1, 1], [], []>} : vector<256x8xbf16>, vector<8x128xbf16>, vector<256x128xf32> -> vector<256x128xf32>
    %11 = arith.addf %7, %10 : vector<256x128xf32>
    %c0_9 = arith.constant 0 : index
    %c0_10 = arith.constant 0 : index
    %12 = vector.load %arg7[%c0_9, %c0_10] : memref<256x128xf32, #tpu.memory_space<vmem>>, vector<256x128xf32>
    tpu.vector_store %arg7[%c0_9, %c0_10], %11 {strides = array<i32>} : memref<256x128xf32, #tpu.memory_space<vmem>>, vector<256x128xf32>,
    %c0_11 = arith.constant 0 : index
    %13 = arith.index_cast %arg2 : i32 to index
    %c1 = arith.constant 1 : index
    %c0_12 = arith.constant 0 : index
    %14 = vector.load %arg3[%c0_11, %13, %c1, %c0_12] : memref<1x18x18x8xbf16, #tpu.memory_space<vmem>>, vector<1x16x16x8xbf16>
    %15 = vector.shape_cast %14 : vector<1x16x16x8xbf16> to vector<16x16x8xbf16>
    %16 = vector.shape_cast %15 : vector<16x16x8xbf16> to vector<256x8xbf16>
    %c0_13 = arith.constant 0 : index
    %c0_14 = arith.constant 0 : index
    %17 = vector.load %arg7[%c0_13, %c0_14] : memref<256x128xf32, #tpu.memory_space<vmem>>, vector<256x128xf32>
    %c0_15 = arith.constant 0 : index
    %c1_16 = arith.constant 1 : index
    %c0_17 = arith.constant 0 : index
    %c0_18 = arith.constant 0 : index
    %18 = vector.load %arg4[%c0_15, %c1_16, %c0_17, %c0_18] : memref<1x3x8x128xbf16, #tpu.memory_space<vmem>>, vector<1x1x8x128xbf16>
    %19 = vector.shape_cast %18 : vector<1x1x8x128xbf16> to vector<8x128xbf16>
    %cst_19 = arith.constant dense<0.000000e+00> : vector<256x128xf32>
    %20 = tpu.matmul %16, %19, %cst_19 {dimension_numbers = #tpu.dot_dimension_numbers<[1], [0], [0], [1], [0, 0, 1, 1], [], []>} : vector<256x8xbf16>, vector<8x128xbf16>, vector<256x128xf32> -> vector<256x128xf32>
    %21 = arith.addf %17, %20 : vector<256x128xf32>
    %c0_20 = arith.constant 0 : index
    %c0_21 = arith.constant 0 : index
    %22 = vector.load %arg7[%c0_20, %c0_21] : memref<256x128xf32, #tpu.memory_space<vmem>>, vector<256x128xf32>
    tpu.vector_store %arg7[%c0_20, %c0_21], %21 {strides = array<i32>} : memref<256x128xf32, #tpu.memory_space<vmem>>, vector<256x128xf32>,
    %c0_22 = arith.constant 0 : index
    %23 = arith.index_cast %arg2 : i32 to index
    %c2 = arith.constant 2 : index
    %c0_23 = arith.constant 0 : index
    %24 = vector.load %arg3[%c0_22, %23, %c2, %c0_23] : memref<1x18x18x8xbf16, #tpu.memory_space<vmem>>, vector<1x16x16x8xbf16>
    %25 = vector.shape_cast %24 : vector<1x16x16x8xbf16> to vector<16x16x8xbf16>
    %26 = vector.shape_cast %25 : vector<16x16x8xbf16> to vector<256x8xbf16>
    %c0_24 = arith.constant 0 : index
    %c0_25 = arith.constant 0 : index
    %27 = vector.load %arg7[%c0_24, %c0_25] : memref<256x128xf32, #tpu.memory_space<vmem>>, vector<256x128xf32>
    %c0_26 = arith.constant 0 : index
    %c2_27 = arith.constant 2 : index
    %c0_28 = arith.constant 0 : index
    %c0_29 = arith.constant 0 : index
    %28 = vector.load %arg4[%c0_26, %c2_27, %c0_28, %c0_29] : memref<1x3x8x128xbf16, #tpu.memory_space<vmem>>, vector<1x1x8x128xbf16>
    %29 = vector.shape_cast %28 : vector<1x1x8x128xbf16> to vector<8x128xbf16>
    %cst_30 = arith.constant dense<0.000000e+00> : vector<256x128xf32>
    %30 = tpu.matmul %26, %29, %cst_30 {dimension_numbers = #tpu.dot_dimension_numbers<[1], [0], [0], [1], [0, 0, 1, 1], [], []>} : vector<256x8xbf16>, vector<8x128xbf16>, vector<256x128xf32> -> vector<256x128xf32>
    %31 = arith.addf %27, %30 : vector<256x128xf32>
    %c0_31 = arith.constant 0 : index
    %c0_32 = arith.constant 0 : index
    %32 = vector.load %arg7[%c0_31, %c0_32] : memref<256x128xf32, #tpu.memory_space<vmem>>, vector<256x128xf32>
    tpu.vector_store %arg7[%c0_31, %c0_32], %31 {strides = array<i32>} : memref<256x128xf32, #tpu.memory_space<vmem>>, vector<256x128xf32>,
    %c2_i32 = arith.constant 2 : i32
    %33 = arith.cmpi eq, %arg2, %c2_i32 : i32
    %34 = arith.extui %33 : i1 to i32
    %c0_i32_33 = arith.constant 0 : i32
    %35 = arith.cmpi ne, %34, %c0_i32_33 : i32
    scf.if %35 {
      %c0_34 = arith.constant 0 : index
      %c0_35 = arith.constant 0 : index
      %36 = vector.load %arg7[%c0_34, %c0_35] : memref<256x128xf32, #tpu.memory_space<vmem>>, vector<256x128xf32>
      %c0_36 = arith.constant 0 : index
      %c0_37 = arith.constant 0 : index
      %37 = vector.load %arg5[%c0_36, %c0_37] : memref<1x128xf32, #tpu.memory_space<vmem>>, vector<1x128xf32>
      %38 = vector.broadcast %37 : vector<1x128xf32> to vector<256x128xf32>
      %39 = arith.addf %36, %38 : vector<256x128xf32>
      %40 = arith.truncf %39 : vector<256x128xf32> to vector<256x128xbf16>
      %c0_38 = arith.constant 0 : index
      %c0_39 = arith.constant 0 : index
      %c0_40 = arith.constant 0 : index
      %41 = vector.load %arg6[%c0_38, %c0_39, %c0_40] : memref<1x256x128xbf16, #tpu.memory_space<vmem>>, vector<1x256x128xbf16>
      %42 = vector.shape_cast %41 : vector<1x256x128xbf16> to vector<256x128xbf16>
      %43 = vector.shape_cast %40 : vector<256x128xbf16> to vector<1x256x128xbf16>
      tpu.vector_store %arg6[%c0_38, %c0_39, %c0_40], %43 {strides = array<i32>} : memref<1x256x128xbf16, #tpu.memory_space<vmem>>, vector<1x256x128xbf16>,
    } else {
    }
    return
  }
  func.func @transform_0(%arg0: i32, %arg1: i32, %arg2: i32) -> (i32, i32, i32, i32) {
    %c0_i32 = arith.constant 0 : i32
    %c0_i32_0 = arith.constant 0 : i32
    %c0_i32_1 = arith.constant 0 : i32
    %c0_i32_2 = arith.constant 0 : i32
    return %arg0, %c0_i32, %c0_i32_0, %c0_i32_1 : i32, i32, i32, i32
  }
  func.func @transform_1(%arg0: i32, %arg1: i32, %arg2: i32) -> (i32, i32, i32, i32) {
    %c0_i32 = arith.constant 0 : i32
    %c0_i32_0 = arith.constant 0 : i32
    %c0_i32_1 = arith.constant 0 : i32
    return %arg2, %c0_i32, %c0_i32_0, %arg1 : i32, i32, i32, i32
  }
  func.func @transform_2(%arg0: i32, %arg1: i32, %arg2: i32) -> (i32, i32) {
    %c0_i32 = arith.constant 0 : i32
    %c0_i32_0 = arith.constant 0 : i32
    return %c0_i32, %arg1 : i32, i32
  }
  func.func @transform_3(%arg0: i32, %arg1: i32, %arg2: i32) -> (i32, i32, i32) {
    %c0_i32 = arith.constant 0 : i32
    %c0_i32_0 = arith.constant 0 : i32
    return %arg0, %c0_i32, %arg1 : i32, i32, i32
  }
}

</mosaic_0001>

<llo_original>
// kernel: tpu_custom_call.1
$region0: #{tpu_custom_call.1}
  #allocation0 [shape = 'u32[]', space=smem, size = 0x4, offset = 0x4, fixed_abs, tag = 'smem constant byte address 0x4 - core index']
  #allocation1 [shape = 'u32[144,128]{1,0:T(1,128)}', space=vmem, size = 0x12000, scoped, tag = 'internal scratch']
  #allocation2 [shape = 'f32[256,128]{1,0:T(8,128)}', space=vmem, size = 0x20000, scoped, tag = 'scratch operand']
  %s0 = inlined_call_operand.hbm [shape: bf16[2,18,18,8], index: 0, kind: input, shape index: {}]
  %s1 = inlined_call_operand.hbm [shape: bf16[3,3,8,128], index: 1, kind: input, shape index: {}]
  %s2 = inlined_call_operand.hbm [shape: f32[1,128], index: 2, kind: input, shape index: {}]
  %s3 = inlined_call_operand.hbm [shape: bf16[2,256,128], index: 3, kind: output, shape index: {}]
  %s4 = sld [smem:[#allocation0]]
  $region65: #{tpu_custom_call.1} parent=0
    _
  %s6 = ssub.s32 1, %s4
  %s7 = scalar_select 0, %s6, %s4
  $region1: #{tpu_custom_call.1} parent=0
    #allocation3 [shape = 'u8[221184]{0}', space=vmem, size = 0x36000, scoped, tag = 'input window, operand 0']
    #allocation4 [shape = 's32[2]{0}', space=sflag, size = 0x8, scoped, tag = 'scoped memory for tpu_custom_call.1']
    #allocation5 [shape = 's32[2]{0}', space=sflag, size = 0x8, scoped, tag = 'scoped memory for tpu_custom_call.1']
    #allocation6 [shape = 'u8[12288]{0}', space=vmem, size = 0x3000, scoped, tag = 'input window, operand 1']
    #allocation7 [shape = 's32[2]{0}', space=sflag, size = 0x8, scoped, tag = 'scoped memory for tpu_custom_call.1']
    #allocation8 [shape = 'u8[512]{0}', space=vmem, size = 0x400, scoped, tag = 'input window, operand 2, single buffered']
    #allocation9 [shape = 'u8[131072]{0}', space=vmem, size = 0x20000, scoped, tag = 'output window, operand 0']
    %8 = vsyncpa [#allocation4], 0
    %s9 = scalar_lea.sflag [#allocation4], 1
    %10 = vsyncpa %s9, 0
    %11 = vsyncpa [#allocation7], 0
    %s12 = scalar_lea.sflag [#allocation7], 1
    %13 = vsyncpa %s12, 0
    %14 = vsyncpa [#allocation5], 0
    %s15 = scalar_lea.sflag [#allocation5], 1
    %16 = vsyncpa %s15, 0
    loop: start=0, step=1, limit=8
    $region2: #{tpu_custom_call.1} parent=1 // loop_pre_header
      _
    $region3: #{tpu_custom_call.1} parent=1 // loop_header
      %s18 = sphi 0, %s22
      %p19 = scmp.ge.s32.totalorder %s18, 8
      %s25 = sphi 0, %s44
      %s26 = sphi 0, %s40
      %s27 = sphi 0, %s36
      %s28 = sphi 0, %s25
      %s29 = sphi 0, %s26
      %s30 = sphi 0, %s27
      %s31 = sphi 0, %s28
      %s32 = sphi 0, %s29
      %s33 = sphi 0, %s30
      %s47 = sphi 0, %s49
      %s50 = sphi 0, %s47
      %s51 = sphi 0, %s50
      %s67 = sphi 0, %s51
      %s75 = sphi 0, %s77
      %s78 = sphi 0, %s75
      %s79 = sphi 0, %s78
      %s95 = sphi 0, %s79
      %s101 = sphi 0, %s103
      %s104 = sphi 0, %s101
      %s105 = sphi 0, %s104
      %s121 = sphi 0, %s105
      %s129 = sphi 0, %s131
      %s132 = sphi 0, %s129
      %s133 = sphi 0, %s132
      %s149 = sphi 0, %s133
    $region4: #{tpu_custom_call.1} parent=1 // loop_header_branch
      %21 = sbr.rel (%p19) target = $region8
    $region5: #{tpu_custom_call.1} parent=1 // loop_body
      %s23 = ssub.s32 %s18, 1
      %s24 = ssub.s32 %s18, 2
      %s34 = sadd.s32 1, %s27
      %p35 = scmp.ge.s32.totalorder %s34, 3
      %s36 = scalar_select %p35, 0, %s34
      %s37 = sadd.s32 1, %s26
      %s38 = scalar_select %p35, %s37, %s26
      %p39 = scmp.ge.s32.totalorder %s38, 1
      %s40 = scalar_select %p39, 0, %s38
      %s41 = sadd.s32 1, %s25
      %s42 = scalar_select %p39, %s41, %s25
      %p43 = scmp.ge.s32.totalorder %s42, 2
      %s44 = scalar_select %p43, 0, %s42
      %s45 = ssub.s32 %s25, %s44
      %p46 = scmp.eq.s32.totalorder %s45, 0
      %s48 = sadd.s32 %s47, 1
      %s49 = scalar_select %p46, %s47, %s48
      %p52 = pneg %p46
      %p53 = scmp.eq.s32.totalorder %s18, 5
      %p54 = por %p52, %p53
      %p55 = scmp.ne.s32.totalorder %s47, %s50
      %p56 = scmp.eq.s32.totalorder %s18, 0
      %p57 = por %p55, %p56
      %p58 = scmp.ne.s32.totalorder %s47, %s50
      %p59 = scmp.eq.s32.totalorder %s23, 5
      %p60 = por %p58, %p59
      %p61 = scmp.ne.s32.totalorder %s50, %s51
      %p62 = scmp.eq.s32.totalorder %s23, 0
      %p63 = por %p61, %p62
      %p64 = scmp.ne.s32.totalorder %s50, %s51
      %p65 = scmp.eq.s32.totalorder %s24, 5
      %p66 = por %p64, %p65
      %p68 = scmp.ne.s32.totalorder %s51, %s67
      %p69 = scmp.eq.s32.totalorder %s24, 0
      %p70 = por %p68, %p69
      %s71 = ssub.s32 %s27, %s36
      %s72 = ssub.s32 %s26, %s40
      %s73 = sor.u32 %s71, %s72
      %p74 = scmp.eq.s32.totalorder %s73, 0
      %s76 = sadd.s32 %s75, 1
      %s77 = scalar_select %p74, %s75, %s76
      %p80 = pneg %p74
      %p81 = scmp.eq.s32.totalorder %s18, 5
      %p82 = por %p80, %p81
      %p83 = scmp.ne.s32.totalorder %s75, %s78
      %p84 = scmp.eq.s32.totalorder %s18, 0
      %p85 = por %p83, %p84
      %p86 = scmp.ne.s32.totalorder %s75, %s78
      %p87 = scmp.eq.s32.totalorder %s23, 5
      %p88 = por %p86, %p87
      %p89 = scmp.ne.s32.totalorder %s78, %s79
      %p90 = scmp.eq.s32.totalorder %s23, 0
      %p91 = por %p89, %p90
      %p92 = scmp.ne.s32.totalorder %s78, %s79
      %p93 = scmp.eq.s32.totalorder %s24, 5
      %p94 = por %p92, %p93
      %p96 = scmp.ne.s32.totalorder %s79, %s95
      %p97 = scmp.eq.s32.totalorder %s24, 0
      %p98 = por %p96, %p97
      %s99 = ssub.s32 %s26, %s40
      %p100 = scmp.eq.s32.totalorder %s99, 0
      %s102 = sadd.s32 %s101, 1
      %s103 = scalar_select %p100, %s101, %s102
      %p106 = pneg %p100
      %p107 = scmp.eq.s32.totalorder %s18, 5
      %p108 = por %p106, %p107
      %p109 = scmp.ne.s32.totalorder %s101, %s104
      %p110 = scmp.eq.s32.totalorder %s18, 0
      %p111 = por %p109, %p110
      %p112 = scmp.ne.s32.totalorder %s101, %s104
      %p113 = scmp.eq.s32.totalorder %s23, 5
      %p114 = por %p112, %p113
      %p115 = scmp.ne.s32.totalorder %s104, %s105
      %p116 = scmp.eq.s32.totalorder %s23, 0
      %p117 = por %p115, %p116
      %p118 = scmp.ne.s32.totalorder %s104, %s105
      %p119 = scmp.eq.s32.totalorder %s24, 5
      %p120 = por %p118, %p119
      %p122 = scmp.ne.s32.totalorder %s105, %s121
      %p123 = scmp.eq.s32.totalorder %s24, 0
      %p124 = por %p122, %p123
      %s125 = ssub.s32 %s25, %s44
      %s126 = ssub.s32 %s26, %s40
      %s127 = sor.u32 %s125, %s126
      %p128 = scmp.eq.s32.totalorder %s127, 0
      %s130 = sadd.s32 %s129, 1
      %s131 = scalar_select %p128, %s129, %s130
      %p134 = pneg %p128
      %p135 = scmp.eq.s32.totalorder %s18, 5
      %p136 = por %p134, %p135
      %p137 = scmp.ne.s32.totalorder %s129, %s132
      %p138 = scmp.eq.s32.totalorder %s18, 0
      %p139 = por %p137, %p138
      %p140 = scmp.ne.s32.totalorder %s129, %s132
      %p141 = scmp.eq.s32.totalorder %s23, 5
      %p142 = por %p140, %p141
      %p143 = scmp.ne.s32.totalorder %s132, %s133
      %p144 = scmp.eq.s32.totalorder %s23, 0
      %p145 = por %p143, %p144
      %p146 = scmp.ne.s32.totalorder %s132, %s133
      %p147 = scmp.eq.s32.totalorder %s24, 5
      %p148 = por %p146, %p147
      %p150 = scmp.ne.s32.totalorder %s133, %s149
      %p151 = scmp.eq.s32.totalorder %s24, 0
      %p152 = por %p150, %p151
      %p153 = scmp.le.s32.totalorder 1, %s18
      %p154 = scmp.lt.s32.totalorder %s18, 7
      %p155 = pnand %p153, %p154
      %p156 = pneg %p155
      // Predicated region
      $region9: #{tpu_custom_call.1} parent=5 // pred_check
        _
      $region10: #{tpu_custom_call.1} parent=5 // pred_check_branch
        %158 = sbr.rel (%p155) target = $region12
      $region11: #{tpu_custom_call.1} parent=5 // pred_region
        %s159 = ssub.s32 %s18, 1
        // Predicated region
        $region13: #{tpu_custom_call.1} parent=11 // pred_check
          %p160 = pneg %p117
        $region14: #{tpu_custom_call.1} parent=11 // pred_check_branch
          %162 = sbr.rel (%p160) target = $region16
        $region15: #{tpu_custom_call.1} parent=11 // pred_region
          %s164 = ssub.s32 16, 16
          %165 = vsyncadd [#allocation7], %s164
          %s166 = smul.addr %s29, 16
          %s167 = scalar_lea.hbm %s2, %s166
          %s169 = sshll.u32 [#allocation8], 4
          %s170 = int_to_ptr.vmem [resolvable:$true] %s169
          %172 = dma.hbm_to_vmem [thread:$0]  %s167, 16, %s170, [#allocation7]
        $region16: #{tpu_custom_call.1} parent=11 // pred_fallthru
          _
      $region12: #{tpu_custom_call.1} parent=5 // pred_fallthru
        _
      %p173 = scmp.lt.s32.totalorder %s18, 6
      // Predicated region
      $region17: #{tpu_custom_call.1} parent=5 // pred_check
        %p174 = pneg %p173
      $region18: #{tpu_custom_call.1} parent=5 // pred_check_branch
        %176 = sbr.rel (%p174) target = $region20
      $region19: #{tpu_custom_call.1} parent=5 // pred_region
        // Predicated region
        $region21: #{tpu_custom_call.1} parent=19 // pred_check
          %p177 = pneg %p57
        $region22: #{tpu_custom_call.1} parent=19 // pred_check_branch
          %179 = sbr.rel (%p177) target = $region24
        $region23: #{tpu_custom_call.1} parent=19 // pred_region
          %s180 = sand.u32 %s47, 1
          %s181 = scalar_lea.sflag [#allocation4], %s180
          %s182 = sand.u32 %s47, 1
          %s183 = smul.addr %s182, 216
          %s184 = scalar_lea.vmem [#allocation3], %s183
          %s186 = ssub.s32 3456, 3456
          %187 = vsyncadd %s181, %s186
          %s188 = smul.addr %s25, 54
          %s189 = smul.addr %s188, 64
          %s190 = scalar_lea.hbm %s0, %s189
          %s191 = sshll.u32 %s184, 4
          %s192 = int_to_ptr.vmem [resolvable:$true] %s191
          %197 = dma.hbm_to_vmem [thread:$0]  %s190, 3456, %s192, %s181, 64, 64, 4
        $region24: #{tpu_custom_call.1} parent=19 // pred_fallthru
          _
        // Predicated region
        $region25: #{tpu_custom_call.1} parent=19 // pred_check
          %p198 = pneg %p85
        $region26: #{tpu_custom_call.1} parent=19 // pred_check_branch
          %200 = sbr.rel (%p198) target = $region28
        $region27: #{tpu_custom_call.1} parent=19 // pred_region
          %s201 = sand.u32 %s18, 1
          %s202 = scalar_lea.sflag [#allocation7], %s201
          %s203 = sand.u32 %s75, 1
          %s204 = smul.addr %s203, 12
          %s205 = scalar_lea.vmem [#allocation6], %s204
          %s207 = ssub.s32 192, 192
          %208 = vsyncadd %s202, %s207
          %s209 = smul.addr %s27, 3
          %s210 = sadd.s32 %s26, %s209
          %s211 = smul.addr %s210, 64
          %s212 = scalar_lea.hbm %s1, %s211
          %s213 = sshll.u32 %s205, 4
          %s214 = int_to_ptr.vmem [resolvable:$true] %s213
          %219 = dma.hbm_to_vmem [thread:$0]  %s212, 192, %s214, %s202, 64, 64, 4
        $region28: #{tpu_custom_call.1} parent=19 // pred_fallthru
          _
      $region20: #{tpu_custom_call.1} parent=5 // pred_fallthru
        _
      %p220 = scmp.le.s32.totalorder 1, %s18
      %p221 = scmp.lt.s32.totalorder %s18, 7
      %p222 = pnand %p220, %p221
      %p223 = pneg %p222
      // Predicated region
      $region29: #{tpu_custom_call.1} parent=5 // pred_check
        _
      $region30: #{tpu_custom_call.1} parent=5 // pred_check_branch
        %225 = sbr.rel (%p222) target = $region32
      $region31: #{tpu_custom_call.1} parent=5 // pred_region
        %s226 = ssub.s32 %s18, 1
        %s227 = sand.u32 %s50, 1
        %s228 = scalar_lea.sflag [#allocation4], %s227
        %s229 = sand.u32 %s50, 1
        %s230 = smul.addr %s229, 216
        %s231 = scalar_lea.vmem [#allocation3], %s230
        // Predicated region
        $region33: #{tpu_custom_call.1} parent=31 // pred_check
          %p232 = pneg %p63
        $region34: #{tpu_custom_call.1} parent=31 // pred_check_branch
          %234 = sbr.rel (%p232) target = $region36
        $region35: #{tpu_custom_call.1} parent=31 // pred_region
          %235 = dma.done %s228, 3456
        $region36: #{tpu_custom_call.1} parent=31 // pred_fallthru
          _
        %s236 = sand.u32 %s23, 1
        %s237 = scalar_lea.sflag [#allocation7], %s236
        %s238 = sand.u32 %s78, 1
        %s239 = smul.addr %s238, 12
        %s240 = scalar_lea.vmem [#allocation6], %s239
        // Predicated region
        $region37: #{tpu_custom_call.1} parent=31 // pred_check
          %p241 = pneg %p91
        $region38: #{tpu_custom_call.1} parent=31 // pred_check_branch
          %243 = sbr.rel (%p241) target = $region40
        $region39: #{tpu_custom_call.1} parent=31 // pred_region
          %244 = dma.done %s237, 192
        $region40: #{tpu_custom_call.1} parent=31 // pred_fallthru
          _
        // Predicated region
        $region41: #{tpu_custom_call.1} parent=31 // pred_check
          %p245 = pneg %p117
        $region42: #{tpu_custom_call.1} parent=31 // pred_check_branch
          %247 = sbr.rel (%p245) target = $region44
        $region43: #{tpu_custom_call.1} parent=31 // pred_region
          %248 = dma.done [#allocation7], 16
        $region44: #{tpu_custom_call.1} parent=31 // pred_fallthru
          _
        %s249 = sand.u32 %s50, 1
        %s250 = scalar_lea.sflag [#allocation4], %s249
        %s251 = sand.u32 %s50, 1
        %s252 = smul.addr %s251, 216
        %s253 = scalar_lea.vmem [#allocation3], %s252
        %p254 = pneg %p63
        %p255 = pneg %p60
        %s256 = sand.u32 %s23, 1
        %s257 = scalar_lea.sflag [#allocation7], %s256
        %s258 = sand.u32 %s78, 1
        %s259 = smul.addr %s258, 12
        %s260 = scalar_lea.vmem [#allocation6], %s259
        %p261 = pneg %p91
        %p262 = pneg %p88
        %p263 = pneg %p117
        %p264 = pneg %p114
        %p265 = pneg %p145
        %p266 = pneg %p142
        %s267 = sand.u32 %s132, 1
        %s268 = scalar_lea.sflag [#allocation5], %s267
        %s269 = sand.u32 %s132, 1
        %s270 = smul.addr %s269, 128
        %s271 = scalar_lea.vmem [#allocation9], %s270
        %p273 = scmp.eq.s32.totalorder %s30, 0
        // Predicated region
        $region45: #{tpu_custom_call.1} parent=31 // pred_check
          %p274 = pneg %p273
        $region46: #{tpu_custom_call.1} parent=31 // pred_check_branch
          %276 = sbr.rel (%p274) target = $region48
        $region47: #{tpu_custom_call.1} parent=31 // pred_region
          %277 = vst [vmem:[#allocation2] sm:$0xff] 0.0
          %278 = vst [vmem:[#allocation2 + $0x8] sm:$0xff] 0.0
          %279 = vst [vmem:[#allocation2 + $0x10] sm:$0xff] 0.0
          %280 = vst [vmem:[#allocation2 + $0x18] sm:$0xff] 0.0
          %281 = vst [vmem:[#allocation2 + $0x20] sm:$0xff] 0.0
          %282 = vst [vmem:[#allocation2 + $0x28] sm:$0xff] 0.0
          %283 = vst [vmem:[#allocation2 + $0x30] sm:$0xff] 0.0
          %284 = vst [vmem:[#allocation2 + $0x38] sm:$0xff] 0.0
          %285 = vst [vmem:[#allocation2 + $0x40] sm:$0xff] 0.0
          %286 = vst [vmem:[#allocation2 + $0x48] sm:$0xff] 0.0
          %287 = vst [vmem:[#allocation2 + $0x50] sm:$0xff] 0.0
          %288 = vst [vmem:[#allocation2 + $0x58] sm:$0xff] 0.0
          %289 = vst [vmem:[#allocation2 + $0x60] sm:$0xff] 0.0
          %290 = vst [vmem:[#allocation2 + $0x68] sm:$0xff] 0.0
          %291 = vst [vmem:[#allocation2 + $0x70] sm:$0xff] 0.0
          %292 = vst [vmem:[#allocation2 + $0x78] sm:$0xff] 0.0
          %293 = vst [vmem:[#allocation2 + $0x80] sm:$0xff] 0.0
          %294 = vst [vmem:[#allocation2 + $0x88] sm:$0xff] 0.0
          %295 = vst [vmem:[#allocation2 + $0x90] sm:$0xff] 0.0
          %296 = vst [vmem:[#allocation2 + $0x98] sm:$0xff] 0.0
          %297 = vst [vmem:[#allocation2 + $0xa0] sm:$0xff] 0.0
          %298 = vst [vmem:[#allocation2 + $0xa8] sm:$0xff] 0.0
          %299 = vst [vmem:[#allocation2 + $0xb0] sm:$0xff] 0.0
          %300 = vst [vmem:[#allocation2 + $0xb8] sm:$0xff] 0.0
          %301 = vst [vmem:[#allocation2 + $0xc0] sm:$0xff] 0.0
          %302 = vst [vmem:[#allocation2 + $0xc8] sm:$0xff] 0.0
          %303 = vst [vmem:[#allocation2 + $0xd0] sm:$0xff] 0.0
          %304 = vst [vmem:[#allocation2 + $0xd8] sm:$0xff] 0.0
          %305 = vst [vmem:[#allocation2 + $0xe0] sm:$0xff] 0.0
          %306 = vst [vmem:[#allocation2 + $0xe8] sm:$0xff] 0.0
          %307 = vst [vmem:[#allocation2 + $0xf0] sm:$0xff] 0.0
          %308 = vst [vmem:[#allocation2 + $0xf8] sm:$0xff] 0.0
        $region48: #{tpu_custom_call.1} parent=31 // pred_fallthru
          _
        %s309 = smul.u32 %s30, 3
        %s310 = smul.addr %s309, 4
        %s311 = scalar_lea.vmem %s231, %s310 [#allocation3]
        %v312 = vld [vmem:[%s311] sm:$0xf]
        %v313 = vld [vmem:[%s311 + $0x4] sm:$0xf]
        %v314 = vld [vmem:[%s311 + $0xc] sm:$0xf]
        %v315 = vld [vmem:[%s311 + $0x10] sm:$0xf]
        %v316 = vld [vmem:[%s311 + $0x18] sm:$0xf]
        %v317 = vld [vmem:[%s311 + $0x1c] sm:$0xf]
        %v318 = vld [vmem:[%s311 + $0x24] sm:$0xf]
        %v319 = vld [vmem:[%s311 + $0x28] sm:$0xf]
        %v320 = vld [vmem:[%s311 + $0x30] sm:$0xf]
        %v321 = vld [vmem:[%s311 + $0x34] sm:$0xf]
        %v322 = vld [vmem:[%s311 + $0x3c] sm:$0xf]
        %v323 = vld [vmem:[%s311 + $0x40] sm:$0xf]
        %v324 = vld [vmem:[%s311 + $0x48] sm:$0xf]
        %v325 = vld [vmem:[%s311 + $0x4c] sm:$0xf]
        %v326 = vld [vmem:[%s311 + $0x54] sm:$0xf]
        %v327 = vld [vmem:[%s311 + $0x58] sm:$0xf]
        %v328 = vld [vmem:[%s311 + $0x60] sm:$0xf]
        %v329 = vld [vmem:[%s311 + $0x64] sm:$0xf]
        %v330 = vld [vmem:[%s311 + $0x6c] sm:$0xf]
        %v331 = vld [vmem:[%s311 + $0x70] sm:$0xf]
        %v332 = vld [vmem:[%s311 + $0x78] sm:$0xf]
        %v333 = vld [vmem:[%s311 + $0x7c] sm:$0xf]
        %v334 = vld [vmem:[%s311 + $0x84] sm:$0xf]
        %v335 = vld [vmem:[%s311 + $0x88] sm:$0xf]
        %v336 = vld [vmem:[%s311 + $0x90] sm:$0xf]
        %v337 = vld [vmem:[%s311 + $0x94] sm:$0xf]
        %v338 = vld [vmem:[%s311 + $0x9c] sm:$0xf]
        %v339 = vld [vmem:[%s311 + $0xa0] sm:$0xf]
        %v340 = vld [vmem:[%s311 + $0xa8] sm:$0xf]
        %v341 = vld [vmem:[%s311 + $0xac] sm:$0xf]
        %v342 = vld [vmem:[%s311 + $0xb4] sm:$0xf]
        %v343 = vld [vmem:[%s311 + $0xb8] sm:$0xf]
        %v344 = vld [vmem:[#allocation2] sm:$0xff]
        %v345 = vld [vmem:[#allocation2 + $0x8] sm:$0xff]
        %v346 = vld [vmem:[#allocation2 + $0x10] sm:$0xff]
        %v347 = vld [vmem:[#allocation2 + $0x18] sm:$0xff]
        %v348 = vld [vmem:[#allocation2 + $0x20] sm:$0xff]
        %v349 = vld [vmem:[#allocation2 + $0x28] sm:$0xff]
        %v350 = vld [vmem:[#allocation2 + $0x30] sm:$0xff]
        %v351 = vld [vmem:[#allocation2 + $0x38] sm:$0xff]
        %v352 = vld [vmem:[#allocation2 + $0x40] sm:$0xff]
        %v353 = vld [vmem:[#allocation2 + $0x48] sm:$0xff]
        %v354 = vld [vmem:[#allocation2 + $0x50] sm:$0xff]
        %v355 = vld [vmem:[#allocation2 + $0x58] sm:$0xff]
        %v356 = vld [vmem:[#allocation2 + $0x60] sm:$0xff]
        %v357 = vld [vmem:[#allocation2 + $0x68] sm:$0xff]
        %v358 = vld [vmem:[#allocation2 + $0x70] sm:$0xff]
        %v359 = vld [vmem:[#allocation2 + $0x78] sm:$0xff]
        %v360 = vld [vmem:[#allocation2 + $0x80] sm:$0xff]
        %v361 = vld [vmem:[#allocation2 + $0x88] sm:$0xff]
        %v362 = vld [vmem:[#allocation2 + $0x90] sm:$0xff]
        %v363 = vld [vmem:[#allocation2 + $0x98] sm:$0xff]
        %v364 = vld [vmem:[#allocation2 + $0xa0] sm:$0xff]
        %v365 = vld [vmem:[#allocation2 + $0xa8] sm:$0xff]
        %v366 = vld [vmem:[#allocation2 + $0xb0] sm:$0xff]
        %v367 = vld [vmem:[#allocation2 + $0xb8] sm:$0xff]
        %v368 = vld [vmem:[#allocation2 + $0xc0] sm:$0xff]
        %v369 = vld [vmem:[#allocation2 + $0xc8] sm:$0xff]
        %v370 = vld [vmem:[#allocation2 + $0xd0] sm:$0xff]
        %v371 = vld [vmem:[#allocation2 + $0xd8] sm:$0xff]
        %v372 = vld [vmem:[#allocation2 + $0xe0] sm:$0xff]
        %v373 = vld [vmem:[#allocation2 + $0xe8] sm:$0xff]
        %v374 = vld [vmem:[#allocation2 + $0xf0] sm:$0xff]
        %v375 = vld [vmem:[#allocation2 + $0xf8] sm:$0xff]
        %v376 = vld [vmem:[%s240] sm:$0xf]
        %v409 = vunpack.c.l.b16 %v312
        %v410 = vunpack.c.l.b16 %v313
        %v411 = vunpack.c.l.b16 %v314
        %v412 = vunpack.c.l.b16 %v315
        %v413 = vunpack.c.l.b16 %v316
        %v414 = vunpack.c.l.b16 %v317
        %v415 = vunpack.c.l.b16 %v318
        %v416 = vunpack.c.l.b16 %v319
        %v417 = vunpack.c.l.b16 %v320
        %v418 = vunpack.c.l.b16 %v321
        %v419 = vunpack.c.l.b16 %v322
        %v420 = vunpack.c.l.b16 %v323
        %v421 = vunpack.c.l.b16 %v324
        %v422 = vunpack.c.l.b16 %v325
        %v423 = vunpack.c.l.b16 %v326
        %v424 = vunpack.c.l.b16 %v327
        %v425 = vunpack.c.l.b16 %v328
        %v426 = vunpack.c.l.b16 %v329
        %v427 = vunpack.c.l.b16 %v330
        %v428 = vunpack.c.l.b16 %v331
        %v429 = vunpack.c.l.b16 %v332
        %v430 = vunpack.c.l.b16 %v333
        %v431 = vunpack.c.l.b16 %v334
        %v432 = vunpack.c.l.b16 %v335
        %v433 = vunpack.c.l.b16 %v336
        %v434 = vunpack.c.l.b16 %v337
        %v435 = vunpack.c.l.b16 %v338
        %v436 = vunpack.c.l.b16 %v339
        %v437 = vunpack.c.l.b16 %v340
        %v438 = vunpack.c.l.b16 %v341
        %v439 = vunpack.c.l.b16 %v342
        %v440 = vunpack.c.l.b16 %v343
        %v441 = vpack.c.b16 %v410, %v409
        %v442 = vpack.c.b16 %v412, %v411
        %v443 = vpack.c.b16 %v414, %v413
        %v444 = vpack.c.b16 %v416, %v415
        %v445 = vpack.c.b16 %v418, %v417
        %v446 = vpack.c.b16 %v420, %v419
        %v447 = vpack.c.b16 %v422, %v421
        %v448 = vpack.c.b16 %v424, %v423
        %v449 = vpack.c.b16 %v426, %v425
        %v450 = vpack.c.b16 %v428, %v427
        %v451 = vpack.c.b16 %v430, %v429
        %v452 = vpack.c.b16 %v432, %v431
        %v453 = vpack.c.b16 %v434, %v433
        %v454 = vpack.c.b16 %v436, %v435
        %v455 = vpack.c.b16 %v438, %v437
        %v456 = vpack.c.b16 %v440, %v439
        %vm457 = vcmask 64512
        %v459 = vsel %vm457, %v441, 0
        %v462 = vsel %vm457, %v442, 0
        %v465 = vsel %vm457, %v443, 0
        %v468 = vsel %vm457, %v444, 0
        %v471 = vsel %vm457, %v445, 0
        %v474 = vsel %vm457, %v446, 0
        %v477 = vsel %vm457, %v447, 0
        %v480 = vsel %vm457, %v448, 0
        %v483 = vsel %vm457, %v449, 0
        %v486 = vsel %vm457, %v450, 0
        %v489 = vsel %vm457, %v451, 0
        %v492 = vsel %vm457, %v452, 0
        %v495 = vsel %vm457, %v453, 0
        %v498 = vsel %vm457, %v454, 0
        %v501 = vsel %vm457, %v455, 0
        %v504 = vsel %vm457, %v456, 0
        %vm506 = vcmask 1043456
        %v508 = vsel %vm506, %v376, 0
        %510 = vmatprep.subr.bf16.mxu0 0
        %511 = vmatpush1.bf16.msra.mxu0 %v508
        %512 = vmatprep.subr.bf16.mxu0 0
        %513 = vmatpush1.bf16.msra.mxu0 0
        %514 = vmatprep.subr.bf16.mxu0 0
        %515 = vmatpush1.bf16.msra.mxu0 0
        %516 = vmatprep.subr.bf16.mxu0 0
        %517 = vmatpush1.bf16.msra.mxu0 0
        %518 = vmatprep.subr.bf16.mxu0 0
        %519 = vmatpush1.bf16.msra.mxu0 0
        %520 = vmatprep.subr.bf16.mxu0 0
        %521 = vmatpush1.bf16.msra.mxu0 0
        %522 = vmatprep.subr.bf16.mxu0 0
        %523 = vmatpush1.bf16.msra.mxu0 0
        %524 = vmatprep.subr.bf16.mxu0 0
        %525 = vmatpush1.bf16.msra.mxu0 0
        %526 = vmatprep.subr.bf16.mxu0 0
        %527 = vmatpush1.bf16.msra.mxu0 0
        %528 = vmatprep.subr.bf16.mxu0 0
        %529 = vmatpush1.bf16.msra.mxu0 0
        %530 = vmatprep.subr.bf16.mxu0 0
        %531 = vmatpush1.bf16.msra.mxu0 0
        %532 = vmatprep.subr.bf16.mxu0 0
        %533 = vmatpush1.bf16.msra.mxu0 0
        %534 = vmatprep.subr.bf16.mxu0 0
        %535 = vmatpush1.bf16.msra.mxu0 0
        %536 = vmatprep.subr.bf16.mxu0 0
        %537 = vmatpush1.bf16.msra.mxu0 0
        %538 = vmatprep.subr.bf16.mxu0 0
        %539 = vmatpush1.bf16.msra.mxu0 0
        %540 = vmatprep.subr.bf16.mxu0 0
        %541 = vmatpush1.bf16.msra.mxu0 0
        %542 = vmatprep.mubr.bf16.mxu0 0
        %543 = vmatmul.mubr.bf16.gmra.mrb[0].mxu0 %v459
        %v544 = vpop.f32.mrb[0].mxu0
        %v545 = vadd.f32 0.0, %v544
        %v546 = vpop.f32.mrb[0].mxu0
        %v547 = vpop.f32.mrb[0].mxu0
        %v548 = vadd.f32 0.0, %v547
        %v549 = vpop.f32.mrb[0].mxu0
        %550 = vmatprep.mubr.bf16.mxu0 0
        %551 = vmatmul.mubr.bf16.gmra.mrb[0].mxu0 %v462
        %v552 = vpop.f32.mrb[0].mxu0
        %v553 = vadd.f32 0.0, %v552
        %v554 = vpop.f32.mrb[0].mxu0
        %v555 = vpop.f32.mrb[0].mxu0
        %v556 = vadd.f32 0.0, %v555
        %v557 = vpop.f32.mrb[0].mxu0
        %558 = vmatprep.mubr.bf16.mxu0 0
        %559 = vmatmul.mubr.bf16.gmra.mrb[0].mxu0 %v465
        %v560 = vpop.f32.mrb[0].mxu0
        %v561 = vadd.f32 0.0, %v560
        %v562 = vpop.f32.mrb[0].mxu0
        %v563 = vpop.f32.mrb[0].mxu0
        %v564 = vadd.f32 0.0, %v563
        %v565 = vpop.f32.mrb[0].mxu0
        %566 = vmatprep.mubr.bf16.mxu0 0
        %567 = vmatmul.mubr.bf16.gmra.mrb[0].mxu0 %v468
        %v568 = vpop.f32.mrb[0].mxu0
        %v569 = vadd.f32 0.0, %v568
        %v570 = vpop.f32.mrb[0].mxu0
        %v571 = vpop.f32.mrb[0].mxu0
        %v572 = vadd.f32 0.0, %v571
        %v573 = vpop.f32.mrb[0].mxu0
        %574 = vmatprep.mubr.bf16.mxu0 0
        %575 = vmatmul.mubr.bf16.gmra.mrb[0].mxu0 %v471
        %v576 = vpop.f32.mrb[0].mxu0
        %v577 = vadd.f32 0.0, %v576
        %v578 = vpop.f32.mrb[0].mxu0
        %v579 = vpop.f32.mrb[0].mxu0
        %v580 = vadd.f32 0.0, %v579
        %v581 = vpop.f32.mrb[0].mxu0
        %582 = vmatprep.mubr.bf16.mxu0 0
        %583 = vmatmul.mubr.bf16.gmra.mrb[0].mxu0 %v474
        %v584 = vpop.f32.mrb[0].mxu0
        %v585 = vadd.f32 0.0, %v584
        %v586 = vpop.f32.mrb[0].mxu0
        %v587 = vpop.f32.mrb[0].mxu0
        %v588 = vadd.f32 0.0, %v587
        %v589 = vpop.f32.mrb[0].mxu0
        %590 = vmatprep.mubr.bf16.mxu0 0
        %591 = vmatmul.mubr.bf16.gmra.mrb[0].mxu0 %v477
        %v592 = vpop.f32.mrb[0].mxu0
        %v593 = vadd.f32 0.0, %v592
        %v594 = vpop.f32.mrb[0].mxu0
        %v595 = vpop.f32.mrb[0].mxu0
        %v596 = vadd.f32 0.0, %v595
        %v597 = vpop.f32.mrb[0].mxu0
        %598 = vmatprep.mubr.bf16.mxu0 0
        %599 = vmatmul.mubr.bf16.gmra.mrb[0].mxu0 %v480
        %v600 = vpop.f32.mrb[0].mxu0
        %v601 = vadd.f32 0.0, %v600
        %v602 = vpop.f32.mrb[0].mxu0
        %v603 = vpop.f32.mrb[0].mxu0
        %v604 = vadd.f32 0.0, %v603
        %v605 = vpop.f32.mrb[0].mxu0
        %606 = vmatprep.mubr.bf16.mxu0 0
        %607 = vmatmul.mubr.bf16.gmra.mrb[0].mxu0 %v483
        %v608 = vpop.f32.mrb[0].mxu0
        %v609 = vadd.f32 0.0, %v608
        %v610 = vpop.f32.mrb[0].mxu0
        %v611 = vpop.f32.mrb[0].mxu0
        %v612 = vadd.f32 0.0, %v611
        %v613 = vpop.f32.mrb[0].mxu0
        %614 = vmatprep.mubr.bf16.mxu0 0
        %615 = vmatmul.mubr.bf16.gmra.mrb[0].mxu0 %v486
        %v616 = vpop.f32.mrb[0].mxu0
        %v617 = vadd.f32 0.0, %v616
        %v618 = vpop.f32.mrb[0].mxu0
        %v619 = vpop.f32.mrb[0].mxu0
        %v620 = vadd.f32 0.0, %v619
        %v621 = vpop.f32.mrb[0].mxu0
        %622 = vmatprep.mubr.bf16.mxu0 0
        %623 = vmatmul.mubr.bf16.gmra.mrb[0].mxu0 %v489
        %v624 = vpop.f32.mrb[0].mxu0
        %v625 = vadd.f32 0.0, %v624
        %v626 = vpop.f32.mrb[0].mxu0
        %v627 = vpop.f32.mrb[0].mxu0
        %v628 = vadd.f32 0.0, %v627
        %v629 = vpop.f32.mrb[0].mxu0
        %630 = vmatprep.mubr.bf16.mxu0 0
        %631 = vmatmul.mubr.bf16.gmra.mrb[0].mxu0 %v492
        %v632 = vpop.f32.mrb[0].mxu0
        %v633 = vadd.f32 0.0, %v632
        %v634 = vpop.f32.mrb[0].mxu0
        %v635 = vpop.f32.mrb[0].mxu0
        %v636 = vadd.f32 0.0, %v635
        %v637 = vpop.f32.mrb[0].mxu0
        %638 = vmatprep.mubr.bf16.mxu0 0
        %639 = vmatmul.mubr.bf16.gmra.mrb[0].mxu0 %v495
        %v640 = vpop.f32.mrb[0].mxu0
        %v641 = vadd.f32 0.0, %v640
        %v642 = vpop.f32.mrb[0].mxu0
        %v643 = vpop.f32.mrb[0].mxu0
        %v644 = vadd.f32 0.0, %v643
        %v645 = vpop.f32.mrb[0].mxu0
        %646 = vmatprep.mubr.bf16.mxu0 0
        %647 = vmatmul.mubr.bf16.gmra.mrb[0].mxu0 %v498
        %v648 = vpop.f32.mrb[0].mxu0
        %v649 = vadd.f32 0.0, %v648
        %v650 = vpop.f32.mrb[0].mxu0
        %v651 = vpop.f32.mrb[0].mxu0
        %v652 = vadd.f32 0.0, %v651
        %v653 = vpop.f32.mrb[0].mxu0
        %654 = vmatprep.mubr.bf16.mxu0 0
        %655 = vmatmul.mubr.bf16.gmra.mrb[0].mxu0 %v501
        %v656 = vpop.f32.mrb[0].mxu0
        %v657 = vadd.f32 0.0, %v656
        %v658 = vpop.f32.mrb[0].mxu0
        %v659 = vpop.f32.mrb[0].mxu0
        %v660 = vadd.f32 0.0, %v659
        %v661 = vpop.f32.mrb[0].mxu0
        %662 = vmatprep.mubr.bf16.mxu0 0
        %663 = vmatmul.mubr.bf16.gmra.mrb[0].mxu0 %v504
        %v664 = vpop.f32.mrb[0].mxu0
        %v665 = vadd.f32 0.0, %v664
        %v666 = vpop.f32.mrb[0].mxu0
        %v667 = vpop.f32.mrb[0].mxu0
        %v668 = vadd.f32 0.0, %v667
        %v669 = vpop.f32.mrb[0].mxu0
        %670 = vdwg.mxu0
        %v671 = vadd.f32 %v344, %v545
        %v672 = vadd.f32 %v345, %v548
        %v673 = vadd.f32 %v346, %v553
        %v674 = vadd.f32 %v347, %v556
        %v675 = vadd.f32 %v348, %v561
        %v676 = vadd.f32 %v349, %v564
        %v677 = vadd.f32 %v350, %v569
        %v678 = vadd.f32 %v351, %v572
        %v679 = vadd.f32 %v352, %v577
        %v680 = vadd.f32 %v353, %v580
        %v681 = vadd.f32 %v354, %v585
        %v682 = vadd.f32 %v355, %v588
        %v683 = vadd.f32 %v356, %v593
        %v684 = vadd.f32 %v357, %v596
        %v685 = vadd.f32 %v358, %v601
        %v686 = vadd.f32 %v359, %v604
        %v687 = vadd.f32 %v360, %v609
        %v688 = vadd.f32 %v361, %v612
        %v689 = vadd.f32 %v362, %v617
        %v690 = vadd.f32 %v363, %v620
        %v691 = vadd.f32 %v364, %v625
        %v692 = vadd.f32 %v365, %v628
        %v693 = vadd.f32 %v366, %v633
        %v694 = vadd.f32 %v367, %v636
        %v695 = vadd.f32 %v368, %v641
        %v696 = vadd.f32 %v369, %v644
        %v697 = vadd.f32 %v370, %v649
        %v698 = vadd.f32 %v371, %v652
        %v699 = vadd.f32 %v372, %v657
        %v700 = vadd.f32 %v373, %v660
        %v701 = vadd.f32 %v374, %v665
        %v702 = vadd.f32 %v375, %v668
        %703 = vst [vmem:[#allocation2] sm:$0xff] %v671
        %704 = vst [vmem:[#allocation2 + $0x8] sm:$0xff] %v672
        %705 = vst [vmem:[#allocation2 + $0x10] sm:$0xff] %v673
        %706 = vst [vmem:[#allocation2 + $0x18] sm:$0xff] %v674
        %707 = vst [vmem:[#allocation2 + $0x20] sm:$0xff] %v675
        %708 = vst [vmem:[#allocation2 + $0x28] sm:$0xff] %v676
        %709 = vst [vmem:[#allocation2 + $0x30] sm:$0xff] %v677
        %710 = vst [vmem:[#allocation2 + $0x38] sm:$0xff] %v678
        %711 = vst [vmem:[#allocation2 + $0x40] sm:$0xff] %v679
        %712 = vst [vmem:[#allocation2 + $0x48] sm:$0xff] %v680
        %713 = vst [vmem:[#allocation2 + $0x50] sm:$0xff] %v681
        %714 = vst [vmem:[#allocation2 + $0x58] sm:$0xff] %v682
        %715 = vst [vmem:[#allocation2 + $0x60] sm:$0xff] %v683
        %716 = vst [vmem:[#allocation2 + $0x68] sm:$0xff] %v684
        %717 = vst [vmem:[#allocation2 + $0x70] sm:$0xff] %v685
        %718 = vst [vmem:[#allocation2 + $0x78] sm:$0xff] %v686
        %719 = vst [vmem:[#allocation2 + $0x80] sm:$0xff] %v687
        %720 = vst [vmem:[#allocation2 + $0x88] sm:$0xff] %v688
        %721 = vst [vmem:[#allocation2 + $0x90] sm:$0xff] %v689
        %722 = vst [vmem:[#allocation2 + $0x98] sm:$0xff] %v690
        %723 = vst [vmem:[#allocation2 + $0xa0] sm:$0xff] %v691
        %724 = vst [vmem:[#allocation2 + $0xa8] sm:$0xff] %v692
        %725 = vst [vmem:[#allocation2 + $0xb0] sm:$0xff] %v693
        %726 = vst [vmem:[#allocation2 + $0xb8] sm:$0xff] %v694
        %727 = vst [vmem:[#allocation2 + $0xc0] sm:$0xff] %v695
        %728 = vst [vmem:[#allocation2 + $0xc8] sm:$0xff] %v696
        %729 = vst [vmem:[#allocation2 + $0xd0] sm:$0xff] %v697
        %730 = vst [vmem:[#allocation2 + $0xd8] sm:$0xff] %v698
        %731 = vst [vmem:[#allocation2 + $0xe0] sm:$0xff] %v699
        %732 = vst [vmem:[#allocation2 + $0xe8] sm:$0xff] %v700
        %733 = vst [vmem:[#allocation2 + $0xf0] sm:$0xff] %v701
        %734 = vst [vmem:[#allocation2 + $0xf8] sm:$0xff] %v702
        %v735 = vld [vmem:[%s311] sm:$0xf]
        %v736 = vld [vmem:[%s311 + $0x4] sm:$0xf]
        %v737 = vld [vmem:[%s311 + $0x8] sm:$0x1]
        %v738 = vld [vmem:[%s311 + $0xc] sm:$0xf]
        %v739 = vld [vmem:[%s311 + $0x10] sm:$0xf]
        %v740 = vld [vmem:[%s311 + $0x14] sm:$0x1]
        %v741 = vld [vmem:[%s311 + $0x18] sm:$0xf]
        %v742 = vld [vmem:[%s311 + $0x1c] sm:$0xf]
        %v743 = vld [vmem:[%s311 + $0x20] sm:$0x1]
        %v744 = vld [vmem:[%s311 + $0x24] sm:$0xf]
        %v745 = vld [vmem:[%s311 + $0x28] sm:$0xf]
        %v746 = vld [vmem:[%s311 + $0x2c] sm:$0x1]
        %v747 = vld [vmem:[%s311 + $0x30] sm:$0xf]
        %v748 = vld [vmem:[%s311 + $0x34] sm:$0xf]
        %v749 = vld [vmem:[%s311 + $0x38] sm:$0x1]
        %v750 = vld [vmem:[%s311 + $0x3c] sm:$0xf]
        %v751 = vld [vmem:[%s311 + $0x40] sm:$0xf]
        %v752 = vld [vmem:[%s311 + $0x44] sm:$0x1]
        %v753 = vld [vmem:[%s311 + $0x48] sm:$0xf]
        %v754 = vld [vmem:[%s311 + $0x4c] sm:$0xf]
        %v755 = vld [vmem:[%s311 + $0x50] sm:$0x1]
        %v756 = vld [vmem:[%s311 + $0x54] sm:$0xf]
        %v757 = vld [vmem:[%s311 + $0x58] sm:$0xf]
        %v758 = vld [vmem:[%s311 + $0x5c] sm:$0x1]
        %v759 = vld [vmem:[%s311 + $0x60] sm:$0xf]
        %v760 = vld [vmem:[%s311 + $0x64] sm:$0xf]
        %v761 = vld [vmem:[%s311 + $0x68] sm:$0x1]
        %v762 = vld [vmem:[%s311 + $0x6c] sm:$0xf]
        %v763 = vld [vmem:[%s311 + $0x70] sm:$0xf]
        %v764 = vld [vmem:[%s311 + $0x74] sm:$0x1]
        %v765 = vld [vmem:[%s311 + $0x78] sm:$0xf]
        %v766 = vld [vmem:[%s311 + $0x7c] sm:$0xf]
        %v767 = vld [vmem:[%s311 + $0x80] sm:$0x1]
        %v768 = vld [vmem:[%s311 + $0x84] sm:$0xf]
        %v769 = vld [vmem:[%s311 + $0x88] sm:$0xf]
        %v770 = vld [vmem:[%s311 + $0x8c] sm:$0x1]
        %v771 = vld [vmem:[%s311 + $0x90] sm:$0xf]
        %v772 = vld [vmem:[%s311 + $0x94] sm:$0xf]
        %v773 = vld [vmem:[%s311 + $0x98] sm:$0x1]
        %v774 = vld [vmem:[%s311 + $0x9c] sm:$0xf]
        %v775 = vld [vmem:[%s311 + $0xa0] sm:$0xf]
        %v776 = vld [vmem:[%s311 + $0xa4] sm:$0x1]
        %v777 = vld [vmem:[%s311 + $0xa8] sm:$0xf]
        %v778 = vld [vmem:[%s311 + $0xac] sm:$0xf]
        %v779 = vld [vmem:[%s311 + $0xb0] sm:$0x1]
        %v780 = vld [vmem:[%s311 + $0xb4] sm:$0xf]
        %v781 = vld [vmem:[%s311 + $0xb8] sm:$0xf]
        %v782 = vld [vmem:[%s311 + $0xbc] sm:$0x1]
        %vm783 = vsmask.f32 3328
        %vm784 = vsmask.f32 7440
        %vm785 = vmor %vm783, %vm784
        %v787 = vshrl.u32 %v735, 16
        %v789 = vrot.slane %v787, 4
        %v790 = vshll.u32 %v735, 16
        %v792 = vrot.slane %v790, 5
        %v793 = vor.u32 %v789, %v792
        %v794 = vrot.slane %v793, 4
        %v796 = vshll.u32 %v736, 16
        %v798 = vrot.slane %v796, 5
        %v799 = vsel %vm785, %v794, %v798
        %v800 = vshrl.u32 %v736, 16
        %v802 = vrot.slane %v800, 4
        %v803 = vor.u32 %v802, %v798
        %v804 = vrot.slane %v803, 4
        %v806 = vshll.u32 %v737, 16
        %v808 = vrot.slane %v806, 5
        %v809 = vsel %vm785, %v804, %v808
        %v811 = vshrl.u32 %v738, 16
        %v813 = vrot.slane %v811, 4
        %v814 = vshll.u32 %v738, 16
        %v816 = vrot.slane %v814, 5
        %v817 = vor.u32 %v813, %v816
        %v818 = vrot.slane %v817, 4
        %v820 = vshll.u32 %v739, 16
        %v822 = vrot.slane %v820, 5
        %v823 = vsel %vm785, %v818, %v822
        %v824 = vshrl.u32 %v739, 16
        %v826 = vrot.slane %v824, 4
        %v827 = vor.u32 %v826, %v822
        %v828 = vrot.slane %v827, 4
        %v830 = vshll.u32 %v740, 16
        %v832 = vrot.slane %v830, 5
        %v833 = vsel %vm785, %v828, %v832
        %v835 = vshrl.u32 %v741, 16
        %v837 = vrot.slane %v835, 4
        %v838 = vshll.u32 %v741, 16
        %v840 = vrot.slane %v838, 5
        %v841 = vor.u32 %v837, %v840
        %v842 = vrot.slane %v841, 4
        %v844 = vshll.u32 %v742, 16
        %v846 = vrot.slane %v844, 5
        %v847 = vsel %vm785, %v842, %v846
        %v848 = vshrl.u32 %v742, 16
        %v850 = vrot.slane %v848, 4
        %v851 = vor.u32 %v850, %v846
        %v852 = vrot.slane %v851, 4
        %v854 = vshll.u32 %v743, 16
        %v856 = vrot.slane %v854, 5
        %v857 = vsel %vm785, %v852, %v856
        %v859 = vshrl.u32 %v744, 16
        %v861 = vrot.slane %v859, 4
        %v862 = vshll.u32 %v744, 16
        %v864 = vrot.slane %v862, 5
        %v865 = vor.u32 %v861, %v864
        %v866 = vrot.slane %v865, 4
        %v868 = vshll.u32 %v745, 16
        %v870 = vrot.slane %v868, 5
        %v871 = vsel %vm785, %v866, %v870
        %v872 = vshrl.u32 %v745, 16
        %v874 = vrot.slane %v872, 4
        %v875 = vor.u32 %v874, %v870
        %v876 = vrot.slane %v875, 4
        %v878 = vshll.u32 %v746, 16
        %v880 = vrot.slane %v878, 5
        %v881 = vsel %vm785, %v876, %v880
        %v883 = vshrl.u32 %v747, 16
        %v885 = vrot.slane %v883, 4
        %v886 = vshll.u32 %v747, 16
        %v888 = vrot.slane %v886, 5
        %v889 = vor.u32 %v885, %v888
        %v890 = vrot.slane %v889, 4
        %v892 = vshll.u32 %v748, 16
        %v894 = vrot.slane %v892, 5
        %v895 = vsel %vm785, %v890, %v894
        %v896 = vshrl.u32 %v748, 16
        %v898 = vrot.slane %v896, 4
        %v899 = vor.u32 %v898, %v894
        %v900 = vrot.slane %v899, 4
        %v902 = vshll.u32 %v749, 16
        %v904 = vrot.slane %v902, 5
        %v905 = vsel %vm785, %v900, %v904
        %v907 = vshrl.u32 %v750, 16
        %v909 = vrot.slane %v907, 4
        %v910 = vshll.u32 %v750, 16
        %v912 = vrot.slane %v910, 5
        %v913 = vor.u32 %v909, %v912
        %v914 = vrot.slane %v913, 4
        %v916 = vshll.u32 %v751, 16
        %v918 = vrot.slane %v916, 5
        %v919 = vsel %vm785, %v914, %v918
        %v920 = vshrl.u32 %v751, 16
        %v922 = vrot.slane %v920, 4
        %v923 = vor.u32 %v922, %v918
        %v924 = vrot.slane %v923, 4
        %v926 = vshll.u32 %v752, 16
        %v928 = vrot.slane %v926, 5
        %v929 = vsel %vm785, %v924, %v928
        %v931 = vshrl.u32 %v753, 16
        %v933 = vrot.slane %v931, 4
        %v934 = vshll.u32 %v753, 16
        %v936 = vrot.slane %v934, 5
        %v937 = vor.u32 %v933, %v936
        %v938 = vrot.slane %v937, 4
        %v940 = vshll.u32 %v754, 16
        %v942 = vrot.slane %v940, 5
        %v943 = vsel %vm785, %v938, %v942
        %v944 = vshrl.u32 %v754, 16
        %v946 = vrot.slane %v944, 4
        %v947 = vor.u32 %v946, %v942
        %v948 = vrot.slane %v947, 4
        %v950 = vshll.u32 %v755, 16
        %v952 = vrot.slane %v950, 5
        %v953 = vsel %vm785, %v948, %v952
        %v955 = vshrl.u32 %v756, 16
        %v957 = vrot.slane %v955, 4
        %v958 = vshll.u32 %v756, 16
        %v960 = vrot.slane %v958, 5
        %v961 = vor.u32 %v957, %v960
        %v962 = vrot.slane %v961, 4
        %v964 = vshll.u32 %v757, 16
        %v966 = vrot.slane %v964, 5
        %v967 = vsel %vm785, %v962, %v966
        %v968 = vshrl.u32 %v757, 16
        %v970 = vrot.slane %v968, 4
        %v971 = vor.u32 %v970, %v966
        %v972 = vrot.slane %v971, 4
        %v974 = vshll.u32 %v758, 16
        %v976 = vrot.slane %v974, 5
        %v977 = vsel %vm785, %v972, %v976
        %v979 = vshrl.u32 %v759, 16
        %v981 = vrot.slane %v979, 4
        %v982 = vshll.u32 %v759, 16
        %v984 = vrot.slane %v982, 5
        %v985 = vor.u32 %v981, %v984
        %v986 = vrot.slane %v985, 4
        %v988 = vshll.u32 %v760, 16
        %v990 = vrot.slane %v988, 5
        %v991 = vsel %vm785, %v986, %v990
        %v992 = vshrl.u32 %v760, 16
        %v994 = vrot.slane %v992, 4
        %v995 = vor.u32 %v994, %v990
        %v996 = vrot.slane %v995, 4
        %v998 = vshll.u32 %v761, 16
        %v1000 = vrot.slane %v998, 5
        %v1001 = vsel %vm785, %v996, %v1000
        %v1003 = vshrl.u32 %v762, 16
        %v1005 = vrot.slane %v1003, 4
        %v1006 = vshll.u32 %v762, 16
        %v1008 = vrot.slane %v1006, 5
        %v1009 = vor.u32 %v1005, %v1008
        %v1010 = vrot.slane %v1009, 4
        %v1012 = vshll.u32 %v763, 16
        %v1014 = vrot.slane %v1012, 5
        %v1015 = vsel %vm785, %v1010, %v1014
        %v1016 = vshrl.u32 %v763, 16
        %v1018 = vrot.slane %v1016, 4
        %v1019 = vor.u32 %v1018, %v1014
        %v1020 = vrot.slane %v1019, 4
        %v1022 = vshll.u32 %v764, 16
        %v1024 = vrot.slane %v1022, 5
        %v1025 = vsel %vm785, %v1020, %v1024
        %v1027 = vshrl.u32 %v765, 16
        %v1029 = vrot.slane %v1027, 4
        %v1030 = vshll.u32 %v765, 16
        %v1032 = vrot.slane %v1030, 5
        %v1033 = vor.u32 %v1029, %v1032
        %v1034 = vrot.slane %v1033, 4
        %v1036 = vshll.u32 %v766, 16
        %v1038 = vrot.slane %v1036, 5
        %v1039 = vsel %vm785, %v1034, %v1038
        %v1040 = vshrl.u32 %v766, 16
        %v1042 = vrot.slane %v1040, 4
        %v1043 = vor.u32 %v1042, %v1038
        %v1044 = vrot.slane %v1043, 4
        %v1046 = vshll.u32 %v767, 16
        %v1048 = vrot.slane %v1046, 5
        %v1049 = vsel %vm785, %v1044, %v1048
        %v1051 = vshrl.u32 %v768, 16
        %v1053 = vrot.slane %v1051, 4
        %v1054 = vshll.u32 %v768, 16
        %v1056 = vrot.slane %v1054, 5
        %v1057 = vor.u32 %v1053, %v1056
        %v1058 = vrot.slane %v1057, 4
        %v1060 = vshll.u32 %v769, 16
        %v1062 = vrot.slane %v1060, 5
        %v1063 = vsel %vm785, %v1058, %v1062
        %v1064 = vshrl.u32 %v769, 16
        %v1066 = vrot.slane %v1064, 4
        %v1067 = vor.u32 %v1066, %v1062
        %v1068 = vrot.slane %v1067, 4
        %v1070 = vshll.u32 %v770, 16
        %v1072 = vrot.slane %v1070, 5
        %v1073 = vsel %vm785, %v1068, %v1072
        %v1075 = vshrl.u32 %v771, 16
        %v1077 = vrot.slane %v1075, 4
        %v1078 = vshll.u32 %v771, 16
        %v1080 = vrot.slane %v1078, 5
        %v1081 = vor.u32 %v1077, %v1080
        %v1082 = vrot.slane %v1081, 4
        %v1084 = vshll.u32 %v772, 16
        %v1086 = vrot.slane %v1084, 5
        %v1087 = vsel %vm785, %v1082, %v1086
        %v1088 = vshrl.u32 %v772, 16
        %v1090 = vrot.slane %v1088, 4
        %v1091 = vor.u32 %v1090, %v1086
        %v1092 = vrot.slane %v1091, 4
        %v1094 = vshll.u32 %v773, 16
        %v1096 = vrot.slane %v1094, 5
        %v1097 = vsel %vm785, %v1092, %v1096
        %v1099 = vshrl.u32 %v774, 16
        %v1101 = vrot.slane %v1099, 4
        %v1102 = vshll.u32 %v774, 16
        %v1104 = vrot.slane %v1102, 5
        %v1105 = vor.u32 %v1101, %v1104
        %v1106 = vrot.slane %v1105, 4
        %v1108 = vshll.u32 %v775, 16
        %v1110 = vrot.slane %v1108, 5
        %v1111 = vsel %vm785, %v1106, %v1110
        %v1112 = vshrl.u32 %v775, 16
        %v1114 = vrot.slane %v1112, 4
        %v1115 = vor.u32 %v1114, %v1110
        %v1116 = vrot.slane %v1115, 4
        %v1118 = vshll.u32 %v776, 16
        %v1120 = vrot.slane %v1118, 5
        %v1121 = vsel %vm785, %v1116, %v1120
        %v1123 = vshrl.u32 %v777, 16
        %v1125 = vrot.slane %v1123, 4
        %v1126 = vshll.u32 %v777, 16
        %v1128 = vrot.slane %v1126, 5
        %v1129 = vor.u32 %v1125, %v1128
        %v1130 = vrot.slane %v1129, 4
        %v1132 = vshll.u32 %v778, 16
        %v1134 = vrot.slane %v1132, 5
        %v1135 = vsel %vm785, %v1130, %v1134
        %v1136 = vshrl.u32 %v778, 16
        %v1138 = vrot.slane %v1136, 4
        %v1139 = vor.u32 %v1138, %v1134
        %v1140 = vrot.slane %v1139, 4
        %v1142 = vshll.u32 %v779, 16
        %v1144 = vrot.slane %v1142, 5
        %v1145 = vsel %vm785, %v1140, %v1144
        %v1147 = vshrl.u32 %v780, 16
        %v1149 = vrot.slane %v1147, 4
        %v1150 = vshll.u32 %v780, 16
        %v1152 = vrot.slane %v1150, 5
        %v1153 = vor.u32 %v1149, %v1152
        %v1154 = vrot.slane %v1153, 4
        %v1156 = vshll.u32 %v781, 16
        %v1158 = vrot.slane %v1156, 5
        %v1159 = vsel %vm785, %v1154, %v1158
        %v1160 = vshrl.u32 %v781, 16
        %v1162 = vrot.slane %v1160, 4
        %v1163 = vor.u32 %v1162, %v1158
        %v1164 = vrot.slane %v1163, 4
        %v1166 = vshll.u32 %v782, 16
        %v1168 = vrot.slane %v1166, 5
        %v1169 = vsel %vm785, %v1164, %v1168
        %v1170 = vld [vmem:[#allocation2] sm:$0xff]
        %v1171 = vld [vmem:[#allocation2 + $0x8] sm:$0xff]
        %v1172 = vld [vmem:[#allocation2 + $0x10] sm:$0xff]
        %v1173 = vld [vmem:[#allocation2 + $0x18] sm:$0xff]
        %v1174 = vld [vmem:[#allocation2 + $0x20] sm:$0xff]
        %v1175 = vld [vmem:[#allocation2 + $0x28] sm:$0xff]
        %v1176 = vld [vmem:[#allocation2 + $0x30] sm:$0xff]
        %v1177 = vld [vmem:[#allocation2 + $0x38] sm:$0xff]
        %v1178 = vld [vmem:[#allocation2 + $0x40] sm:$0xff]
        %v1179 = vld [vmem:[#allocation2 + $0x48] sm:$0xff]
        %v1180 = vld [vmem:[#allocation2 + $0x50] sm:$0xff]
        %v1181 = vld [vmem:[#allocation2 + $0x58] sm:$0xff]
        %v1182 = vld [vmem:[#allocation2 + $0x60] sm:$0xff]
        %v1183 = vld [vmem:[#allocation2 + $0x68] sm:$0xff]
        %v1184 = vld [vmem:[#allocation2 + $0x70] sm:$0xff]
        %v1185 = vld [vmem:[#allocation2 + $0x78] sm:$0xff]
        %v1186 = vld [vmem:[#allocation2 + $0x80] sm:$0xff]
        %v1187 = vld [vmem:[#allocation2 + $0x88] sm:$0xff]
        %v1188 = vld [vmem:[#allocation2 + $0x90] sm:$0xff]
        %v1189 = vld [vmem:[#allocation2 + $0x98] sm:$0xff]
        %v1190 = vld [vmem:[#allocation2 + $0xa0] sm:$0xff]
        %v1191 = vld [vmem:[#allocation2 + $0xa8] sm:$0xff]
        %v1192 = vld [vmem:[#allocation2 + $0xb0] sm:$0xff]
        %v1193 = vld [vmem:[#allocation2 + $0xb8] sm:$0xff]
        %v1194 = vld [vmem:[#allocation2 + $0xc0] sm:$0xff]
        %v1195 = vld [vmem:[#allocation2 + $0xc8] sm:$0xff]
        %v1196 = vld [vmem:[#allocation2 + $0xd0] sm:$0xff]
        %v1197 = vld [vmem:[#allocation2 + $0xd8] sm:$0xff]
        %v1198 = vld [vmem:[#allocation2 + $0xe0] sm:$0xff]
        %v1199 = vld [vmem:[#allocation2 + $0xe8] sm:$0xff]
        %v1200 = vld [vmem:[#allocation2 + $0xf0] sm:$0xff]
        %v1201 = vld [vmem:[#allocation2 + $0xf8] sm:$0xff]
        %s1202 = scalar_lea.vmem %s240, 4 [#allocation6]
        %v1203 = vld [vmem:[%s1202] sm:$0xf]
        %v1204 = vunpack.c.l.b16 %v799
        %v1205 = vunpack.c.l.b16 %v809
        %v1206 = vunpack.c.l.b16 %v823
        %v1207 = vunpack.c.l.b16 %v833
        %v1208 = vunpack.c.l.b16 %v847
        %v1209 = vunpack.c.l.b16 %v857
        %v1210 = vunpack.c.l.b16 %v871
        %v1211 = vunpack.c.l.b16 %v881
        %v1212 = vunpack.c.l.b16 %v895
        %v1213 = vunpack.c.l.b16 %v905
        %v1214 = vunpack.c.l.b16 %v919
        %v1215 = vunpack.c.l.b16 %v929
        %v1216 = vunpack.c.l.b16 %v943
        %v1217 = vunpack.c.l.b16 %v953
        %v1218 = vunpack.c.l.b16 %v967
        %v1219 = vunpack.c.l.b16 %v977
        %v1220 = vunpack.c.l.b16 %v991
        %v1221 = vunpack.c.l.b16 %v1001
        %v1222 = vunpack.c.l.b16 %v1015
        %v1223 = vunpack.c.l.b16 %v1025
        %v1224 = vunpack.c.l.b16 %v1039
        %v1225 = vunpack.c.l.b16 %v1049
        %v1226 = vunpack.c.l.b16 %v1063
        %v1227 = vunpack.c.l.b16 %v1073
        %v1228 = vunpack.c.l.b16 %v1087
        %v1229 = vunpack.c.l.b16 %v1097
        %v1230 = vunpack.c.l.b16 %v1111
        %v1231 = vunpack.c.l.b16 %v1121
        %v1232 = vunpack.c.l.b16 %v1135
        %v1233 = vunpack.c.l.b16 %v1145
        %v1234 = vunpack.c.l.b16 %v1159
        %v1235 = vunpack.c.l.b16 %v1169
        %v1236 = vpack.c.b16 %v1205, %v1204
        %v1237 = vpack.c.b16 %v1207, %v1206
        %v1238 = vpack.c.b16 %v1209, %v1208
        %v1239 = vpack.c.b16 %v1211, %v1210
        %v1240 = vpack.c.b16 %v1213, %v1212
        %v1241 = vpack.c.b16 %v1215, %v1214
        %v1242 = vpack.c.b16 %v1217, %v1216
        %v1243 = vpack.c.b16 %v1219, %v1218
        %v1244 = vpack.c.b16 %v1221, %v1220
        %v1245 = vpack.c.b16 %v1223, %v1222
        %v1246 = vpack.c.b16 %v1225, %v1224
        %v1247 = vpack.c.b16 %v1227, %v1226
        %v1248 = vpack.c.b16 %v1229, %v1228
        %v1249 = vpack.c.b16 %v1231, %v1230
        %v1250 = vpack.c.b16 %v1233, %v1232
        %v1251 = vpack.c.b16 %v1235, %v1234
        %v1253 = vsel %vm457, %v1236, 0
        %v1256 = vsel %vm457, %v1237, 0
        %v1259 = vsel %vm457, %v1238, 0
        %v1262 = vsel %vm457, %v1239, 0
        %v1265 = vsel %vm457, %v1240, 0
        %v1268 = vsel %vm457, %v1241, 0
        %v1271 = vsel %vm457, %v1242, 0
        %v1274 = vsel %vm457, %v1243, 0
        %v1277 = vsel %vm457, %v1244, 0
        %v1280 = vsel %vm457, %v1245, 0
        %v1283 = vsel %vm457, %v1246, 0
        %v1286 = vsel %vm457, %v1247, 0
        %v1289 = vsel %vm457, %v1248, 0
        %v1292 = vsel %vm457, %v1249, 0
        %v1295 = vsel %vm457, %v1250, 0
        %v1298 = vsel %vm457, %v1251, 0
        %v1301 = vsel %vm506, %v1203, 0
        %1303 = vmatprep.subr.bf16.mxu0 0
        %1304 = vmatpush1.bf16.msra.mxu0 %v1301
        %1305 = vmatprep.subr.bf16.mxu0 0
        %1306 = vmatpush1.bf16.msra.mxu0 0
        %1307 = vmatprep.subr.bf16.mxu0 0
        %1308 = vmatpush1.bf16.msra.mxu0 0
        %1309 = vmatprep.subr.bf16.mxu0 0
        %1310 = vmatpush1.bf16.msra.mxu0 0
        %1311 = vmatprep.subr.bf16.mxu0 0
        %1312 = vmatpush1.bf16.msra.mxu0 0
        %1313 = vmatprep.subr.bf16.mxu0 0
        %1314 = vmatpush1.bf16.msra.mxu0 0
        %1315 = vmatprep.subr.bf16.mxu0 0
        %1316 = vmatpush1.bf16.msra.mxu0 0
        %1317 = vmatprep.subr.bf16.mxu0 0
        %1318 = vmatpush1.bf16.msra.mxu0 0
        %1319 = vmatprep.subr.bf16.mxu0 0
        %1320 = vmatpush1.bf16.msra.mxu0 0
        %1321 = vmatprep.subr.bf16.mxu0 0
        %1322 = vmatpush1.bf16.msra.mxu0 0
        %1323 = vmatprep.subr.bf16.mxu0 0
        %1324 = vmatpush1.bf16.msra.mxu0 0
        %1325 = vmatprep.subr.bf16.mxu0 0
        %1326 = vmatpush1.bf16.msra.mxu0 0
        %1327 = vmatprep.subr.bf16.mxu0 0
        %1328 = vmatpush1.bf16.msra.mxu0 0
        %1329 = vmatprep.subr.bf16.mxu0 0
        %1330 = vmatpush1.bf16.msra.mxu0 0
        %1331 = vmatprep.subr.bf16.mxu0 0
        %1332 = vmatpush1.bf16.msra.mxu0 0
        %1333 = vmatprep.subr.bf16.mxu0 0
        %1334 = vmatpush1.bf16.msra.mxu0 0
        %1335 = vmatprep.mubr.bf16.mxu0 0
        %1336 = vmatmul.mubr.bf16.gmra.mrb[0].mxu0 %v1253
        %v1337 = vpop.f32.mrb[0].mxu0
        %v1338 = vadd.f32 0.0, %v1337
        %v1339 = vpop.f32.mrb[0].mxu0
        %v1340 = vpop.f32.mrb[0].mxu0
        %v1341 = vadd.f32 0.0, %v1340
        %v1342 = vpop.f32.mrb[0].mxu0
        %1343 = vmatprep.mubr.bf16.mxu0 0
        %1344 = vmatmul.mubr.bf16.gmra.mrb[0].mxu0 %v1256
        %v1345 = vpop.f32.mrb[0].mxu0
        %v1346 = vadd.f32 0.0, %v1345
        %v1347 = vpop.f32.mrb[0].mxu0
        %v1348 = vpop.f32.mrb[0].mxu0
        %v1349 = vadd.f32 0.0, %v1348
        %v1350 = vpop.f32.mrb[0].mxu0
        %1351 = vmatprep.mubr.bf16.mxu0 0
        %1352 = vmatmul.mubr.bf16.gmra.mrb[0].mxu0 %v1259
        %v1353 = vpop.f32.mrb[0].mxu0
        %v1354 = vadd.f32 0.0, %v1353
        %v1355 = vpop.f32.mrb[0].mxu0
        %v1356 = vpop.f32.mrb[0].mxu0
        %v1357 = vadd.f32 0.0, %v1356
        %v1358 = vpop.f32.mrb[0].mxu0
        %1359 = vmatprep.mubr.bf16.mxu0 0
        %1360 = vmatmul.mubr.bf16.gmra.mrb[0].mxu0 %v1262
        %v1361 = vpop.f32.mrb[0].mxu0
        %v1362 = vadd.f32 0.0, %v1361
        %v1363 = vpop.f32.mrb[0].mxu0
        %v1364 = vpop.f32.mrb[0].mxu0
        %v1365 = vadd.f32 0.0, %v1364
        %v1366 = vpop.f32.mrb[0].mxu0
        %1367 = vmatprep.mubr.bf16.mxu0 0
        %1368 = vmatmul.mubr.bf16.gmra.mrb[0].mxu0 %v1265
        %v1369 = vpop.f32.mrb[0].mxu0
        %v1370 = vadd.f32 0.0, %v1369
        %v1371 = vpop.f32.mrb[0].mxu0
        %v1372 = vpop.f32.mrb[0].mxu0
        %v1373 = vadd.f32 0.0, %v1372
        %v1374 = vpop.f32.mrb[0].mxu0
        %1375 = vmatprep.mubr.bf16.mxu0 0
        %1376 = vmatmul.mubr.bf16.gmra.mrb[0].mxu0 %v1268
        %v1377 = vpop.f32.mrb[0].mxu0
        %v1378 = vadd.f32 0.0, %v1377
        %v1379 = vpop.f32.mrb[0].mxu0
        %v1380 = vpop.f32.mrb[0].mxu0
        %v1381 = vadd.f32 0.0, %v1380
        %v1382 = vpop.f32.mrb[0].mxu0
        %1383 = vmatprep.mubr.bf16.mxu0 0
        %1384 = vmatmul.mubr.bf16.gmra.mrb[0].mxu0 %v1271
        %v1385 = vpop.f32.mrb[0].mxu0
        %v1386 = vadd.f32 0.0, %v1385
        %v1387 = vpop.f32.mrb[0].mxu0
        %v1388 = vpop.f32.mrb[0].mxu0
        %v1389 = vadd.f32 0.0, %v1388
        %v1390 = vpop.f32.mrb[0].mxu0
        %1391 = vmatprep.mubr.bf16.mxu0 0
        %1392 = vmatmul.mubr.bf16.gmra.mrb[0].mxu0 %v1274
        %v1393 = vpop.f32.mrb[0].mxu0
        %v1394 = vadd.f32 0.0, %v1393
        %v1395 = vpop.f32.mrb[0].mxu0
        %v1396 = vpop.f32.mrb[0].mxu0
        %v1397 = vadd.f32 0.0, %v1396
        %v1398 = vpop.f32.mrb[0].mxu0
        %1399 = vmatprep.mubr.bf16.mxu0 0
        %1400 = vmatmul.mubr.bf16.gmra.mrb[0].mxu0 %v1277
        %v1401 = vpop.f32.mrb[0].mxu0
        %v1402 = vadd.f32 0.0, %v1401
        %v1403 = vpop.f32.mrb[0].mxu0
        %v1404 = vpop.f32.mrb[0].mxu0
        %v1405 = vadd.f32 0.0, %v1404
        %v1406 = vpop.f32.mrb[0].mxu0
        %1407 = vmatprep.mubr.bf16.mxu0 0
        %1408 = vmatmul.mubr.bf16.gmra.mrb[0].mxu0 %v1280
        %v1409 = vpop.f32.mrb[0].mxu0
        %v1410 = vadd.f32 0.0, %v1409
        %v1411 = vpop.f32.mrb[0].mxu0
        %v1412 = vpop.f32.mrb[0].mxu0
        %v1413 = vadd.f32 0.0, %v1412
        %v1414 = vpop.f32.mrb[0].mxu0
        %1415 = vmatprep.mubr.bf16.mxu0 0
        %1416 = vmatmul.mubr.bf16.gmra.mrb[0].mxu0 %v1283
        %v1417 = vpop.f32.mrb[0].mxu0
        %v1418 = vadd.f32 0.0, %v1417
        %v1419 = vpop.f32.mrb[0].mxu0
        %v1420 = vpop.f32.mrb[0].mxu0
        %v1421 = vadd.f32 0.0, %v1420
        %v1422 = vpop.f32.mrb[0].mxu0
        %1423 = vmatprep.mubr.bf16.mxu0 0
        %1424 = vmatmul.mubr.bf16.gmra.mrb[0].mxu0 %v1286
        %v1425 = vpop.f32.mrb[0].mxu0
        %v1426 = vadd.f32 0.0, %v1425
        %v1427 = vpop.f32.mrb[0].mxu0
        %v1428 = vpop.f32.mrb[0].mxu0
        %v1429 = vadd.f32 0.0, %v1428
        %v1430 = vpop.f32.mrb[0].mxu0
        %1431 = vmatprep.mubr.bf16.mxu0 0
        %1432 = vmatmul.mubr.bf16.gmra.mrb[0].mxu0 %v1289
        %v1433 = vpop.f32.mrb[0].mxu0
        %v1434 = vadd.f32 0.0, %v1433
        %v1435 = vpop.f32.mrb[0].mxu0
        %v1436 = vpop.f32.mrb[0].mxu0
        %v1437 = vadd.f32 0.0, %v1436
        %v1438 = vpop.f32.mrb[0].mxu0
        %1439 = vmatprep.mubr.bf16.mxu0 0
        %1440 = vmatmul.mubr.bf16.gmra.mrb[0].mxu0 %v1292
        %v1441 = vpop.f32.mrb[0].mxu0
        %v1442 = vadd.f32 0.0, %v1441
        %v1443 = vpop.f32.mrb[0].mxu0
        %v1444 = vpop.f32.mrb[0].mxu0
        %v1445 = vadd.f32 0.0, %v1444
        %v1446 = vpop.f32.mrb[0].mxu0
        %1447 = vmatprep.mubr.bf16.mxu0 0
        %1448 = vmatmul.mubr.bf16.gmra.mrb[0].mxu0 %v1295
        %v1449 = vpop.f32.mrb[0].mxu0
        %v1450 = vadd.f32 0.0, %v1449
        %v1451 = vpop.f32.mrb[0].mxu0
        %v1452 = vpop.f32.mrb[0].mxu0
        %v1453 = vadd.f32 0.0, %v1452
        %v1454 = vpop.f32.mrb[0].mxu0
        %1455 = vmatprep.mubr.bf16.mxu0 0
        %1456 = vmatmul.mubr.bf16.gmra.mrb[0].mxu0 %v1298
        %v1457 = vpop.f32.mrb[0].mxu0
        %v1458 = vadd.f32 0.0, %v1457
        %v1459 = vpop.f32.mrb[0].mxu0
        %v1460 = vpop.f32.mrb[0].mxu0
        %v1461 = vadd.f32 0.0, %v1460
        %v1462 = vpop.f32.mrb[0].mxu0
        %1463 = vdwg.mxu0
        %v1464 = vadd.f32 %v1170, %v1338
        %v1465 = vadd.f32 %v1171, %v1341
        %v1466 = vadd.f32 %v1172, %v1346
        %v1467 = vadd.f32 %v1173, %v1349
        %v1468 = vadd.f32 %v1174, %v1354
        %v1469 = vadd.f32 %v1175, %v1357
        %v1470 = vadd.f32 %v1176, %v1362
        %v1471 = vadd.f32 %v1177, %v1365
        %v1472 = vadd.f32 %v1178, %v1370
        %v1473 = vadd.f32 %v1179, %v1373
        %v1474 = vadd.f32 %v1180, %v1378
        %v1475 = vadd.f32 %v1181, %v1381
        %v1476 = vadd.f32 %v1182, %v1386
        %v1477 = vadd.f32 %v1183, %v1389
        %v1478 = vadd.f32 %v1184, %v1394
        %v1479 = vadd.f32 %v1185, %v1397
        %v1480 = vadd.f32 %v1186, %v1402
        %v1481 = vadd.f32 %v1187, %v1405
        %v1482 = vadd.f32 %v1188, %v1410
        %v1483 = vadd.f32 %v1189, %v1413
        %v1484 = vadd.f32 %v1190, %v1418
        %v1485 = vadd.f32 %v1191, %v1421
        %v1486 = vadd.f32 %v1192, %v1426
        %v1487 = vadd.f32 %v1193, %v1429
        %v1488 = vadd.f32 %v1194, %v1434
        %v1489 = vadd.f32 %v1195, %v1437
        %v1490 = vadd.f32 %v1196, %v1442
        %v1491 = vadd.f32 %v1197, %v1445
        %v1492 = vadd.f32 %v1198, %v1450
        %v1493 = vadd.f32 %v1199, %v1453
        %v1494 = vadd.f32 %v1200, %v1458
        %v1495 = vadd.f32 %v1201, %v1461
        %1496 = vst [vmem:[#allocation2] sm:$0xff] %v1464
        %1497 = vst [vmem:[#allocation2 + $0x8] sm:$0xff] %v1465
        %1498 = vst [vmem:[#allocation2 + $0x10] sm:$0xff] %v1466
        %1499 = vst [vmem:[#allocation2 + $0x18] sm:$0xff] %v1467
        %1500 = vst [vmem:[#allocation2 + $0x20] sm:$0xff] %v1468
        %1501 = vst [vmem:[#allocation2 + $0x28] sm:$0xff] %v1469
        %1502 = vst [vmem:[#allocation2 + $0x30] sm:$0xff] %v1470
        %1503 = vst [vmem:[#allocation2 + $0x38] sm:$0xff] %v1471
        %1504 = vst [vmem:[#allocation2 + $0x40] sm:$0xff] %v1472
        %1505 = vst [vmem:[#allocation2 + $0x48] sm:$0xff] %v1473
        %1506 = vst [vmem:[#allocation2 + $0x50] sm:$0xff] %v1474
        %1507 = vst [vmem:[#allocation2 + $0x58] sm:$0xff] %v1475
        %1508 = vst [vmem:[#allocation2 + $0x60] sm:$0xff] %v1476
        %1509 = vst [vmem:[#allocation2 + $0x68] sm:$0xff] %v1477
        %1510 = vst [vmem:[#allocation2 + $0x70] sm:$0xff] %v1478
        %1511 = vst [vmem:[#allocation2 + $0x78] sm:$0xff] %v1479
        %1512 = vst [vmem:[#allocation2 + $0x80] sm:$0xff] %v1480
        %1513 = vst [vmem:[#allocation2 + $0x88] sm:$0xff] %v1481
        %1514 = vst [vmem:[#allocation2 + $0x90] sm:$0xff] %v1482
        %1515 = vst [vmem:[#allocation2 + $0x98] sm:$0xff] %v1483
        %1516 = vst [vmem:[#allocation2 + $0xa0] sm:$0xff] %v1484
        %1517 = vst [vmem:[#allocation2 + $0xa8] sm:$0xff] %v1485
        %1518 = vst [vmem:[#allocation2 + $0xb0] sm:$0xff] %v1486
        %1519 = vst [vmem:[#allocation2 + $0xb8] sm:$0xff] %v1487
        %1520 = vst [vmem:[#allocation2 + $0xc0] sm:$0xff] %v1488
        %1521 = vst [vmem:[#allocation2 + $0xc8] sm:$0xff] %v1489
        %1522 = vst [vmem:[#allocation2 + $0xd0] sm:$0xff] %v1490
        %1523 = vst [vmem:[#allocation2 + $0xd8] sm:$0xff] %v1491
        %1524 = vst [vmem:[#allocation2 + $0xe0] sm:$0xff] %v1492
        %1525 = vst [vmem:[#allocation2 + $0xe8] sm:$0xff] %v1493
        %1526 = vst [vmem:[#allocation2 + $0xf0] sm:$0xff] %v1494
        %1527 = vst [vmem:[#allocation2 + $0xf8] sm:$0xff] %v1495
        %v1528 = vld [vmem:[%s311] sm:$0xe]
        %v1529 = vld [vmem:[%s311 + $0x4] sm:$0xf]
        %v1530 = vld [vmem:[%s311 + $0x8] sm:$0x1]
        %v1531 = vld [vmem:[%s311 + $0xc] sm:$0xe]
        %v1532 = vld [vmem:[%s311 + $0x10] sm:$0xf]
        %v1533 = vld [vmem:[%s311 + $0x14] sm:$0x1]
        %v1534 = vld [vmem:[%s311 + $0x18] sm:$0xe]
        %v1535 = vld [vmem:[%s311 + $0x1c] sm:$0xf]
        %v1536 = vld [vmem:[%s311 + $0x20] sm:$0x1]
        %v1537 = vld [vmem:[%s311 + $0x24] sm:$0xe]
        %v1538 = vld [vmem:[%s311 + $0x28] sm:$0xf]
        %v1539 = vld [vmem:[%s311 + $0x2c] sm:$0x1]
        %v1540 = vld [vmem:[%s311 + $0x30] sm:$0xe]
        %v1541 = vld [vmem:[%s311 + $0x34] sm:$0xf]
        %v1542 = vld [vmem:[%s311 + $0x38] sm:$0x1]
        %v1543 = vld [vmem:[%s311 + $0x3c] sm:$0xe]
        %v1544 = vld [vmem:[%s311 + $0x40] sm:$0xf]
        %v1545 = vld [vmem:[%s311 + $0x44] sm:$0x1]
        %v1546 = vld [vmem:[%s311 + $0x48] sm:$0xe]
        %v1547 = vld [vmem:[%s311 + $0x4c] sm:$0xf]
        %v1548 = vld [vmem:[%s311 + $0x50] sm:$0x1]
        %v1549 = vld [vmem:[%s311 + $0x54] sm:$0xe]
        %v1550 = vld [vmem:[%s311 + $0x58] sm:$0xf]
        %v1551 = vld [vmem:[%s311 + $0x5c] sm:$0x1]
        %v1552 = vld [vmem:[%s311 + $0x60] sm:$0xe]
        %v1553 = vld [vmem:[%s311 + $0x64] sm:$0xf]
        %v1554 = vld [vmem:[%s311 + $0x68] sm:$0x1]
        %v1555 = vld [vmem:[%s311 + $0x6c] sm:$0xe]
        %v1556 = vld [vmem:[%s311 + $0x70] sm:$0xf]
        %v1557 = vld [vmem:[%s311 + $0x74] sm:$0x1]
        %v1558 = vld [vmem:[%s311 + $0x78] sm:$0xe]
        %v1559 = vld [vmem:[%s311 + $0x7c] sm:$0xf]
        %v1560 = vld [vmem:[%s311 + $0x80] sm:$0x1]
        %v1561 = vld [vmem:[%s311 + $0x84] sm:$0xe]
        %v1562 = vld [vmem:[%s311 + $0x88] sm:$0xf]
        %v1563 = vld [vmem:[%s311 + $0x8c] sm:$0x1]
        %v1564 = vld [vmem:[%s311 + $0x90] sm:$0xe]
        %v1565 = vld [vmem:[%s311 + $0x94] sm:$0xf]
        %v1566 = vld [vmem:[%s311 + $0x98] sm:$0x1]
        %v1567 = vld [vmem:[%s311 + $0x9c] sm:$0xe]
        %v1568 = vld [vmem:[%s311 + $0xa0] sm:$0xf]
        %v1569 = vld [vmem:[%s311 + $0xa4] sm:$0x1]
        %v1570 = vld [vmem:[%s311 + $0xa8] sm:$0xe]
        %v1571 = vld [vmem:[%s311 + $0xac] sm:$0xf]
        %v1572 = vld [vmem:[%s311 + $0xb0] sm:$0x1]
        %v1573 = vld [vmem:[%s311 + $0xb4] sm:$0xe]
        %v1574 = vld [vmem:[%s311 + $0xb8] sm:$0xf]
        %v1575 = vld [vmem:[%s311 + $0xbc] sm:$0x1]
        %vm1624 = vcmask 1042432
        %vm1625 = vcmask 1046532
        %vm1626 = vmor %vm1624, %vm1625
        %v1627 = vrot.slane %v1528, 5
        %v1628 = vrot.slane %v1627, 4
        %v1629 = vrot.slane %v1529, 5
        %v1630 = vsel %vm1626, %v1628, %v1629
        %v1631 = vrot.slane %v1629, 4
        %v1632 = vrot.slane %v1530, 5
        %v1633 = vsel %vm1626, %v1631, %v1632
        %v1634 = vrot.slane %v1531, 5
        %v1635 = vrot.slane %v1634, 4
        %v1636 = vrot.slane %v1532, 5
        %v1637 = vsel %vm1626, %v1635, %v1636
        %v1638 = vrot.slane %v1636, 4
        %v1639 = vrot.slane %v1533, 5
        %v1640 = vsel %vm1626, %v1638, %v1639
        %v1641 = vrot.slane %v1534, 5
        %v1642 = vrot.slane %v1641, 4
        %v1643 = vrot.slane %v1535, 5
        %v1644 = vsel %vm1626, %v1642, %v1643
        %v1645 = vrot.slane %v1643, 4
        %v1646 = vrot.slane %v1536, 5
        %v1647 = vsel %vm1626, %v1645, %v1646
        %v1648 = vrot.slane %v1537, 5
        %v1649 = vrot.slane %v1648, 4
        %v1650 = vrot.slane %v1538, 5
        %v1651 = vsel %vm1626, %v1649, %v1650
        %v1652 = vrot.slane %v1650, 4
        %v1653 = vrot.slane %v1539, 5
        %v1654 = vsel %vm1626, %v1652, %v1653
        %v1655 = vrot.slane %v1540, 5
        %v1656 = vrot.slane %v1655, 4
        %v1657 = vrot.slane %v1541, 5
        %v1658 = vsel %vm1626, %v1656, %v1657
        %v1659 = vrot.slane %v1657, 4
        %v1660 = vrot.slane %v1542, 5
        %v1661 = vsel %vm1626, %v1659, %v1660
        %v1662 = vrot.slane %v1543, 5
        %v1663 = vrot.slane %v1662, 4
        %v1664 = vrot.slane %v1544, 5
        %v1665 = vsel %vm1626, %v1663, %v1664
        %v1666 = vrot.slane %v1664, 4
        %v1667 = vrot.slane %v1545, 5
        %v1668 = vsel %vm1626, %v1666, %v1667
        %v1669 = vrot.slane %v1546, 5
        %v1670 = vrot.slane %v1669, 4
        %v1671 = vrot.slane %v1547, 5
        %v1672 = vsel %vm1626, %v1670, %v1671
        %v1673 = vrot.slane %v1671, 4
        %v1674 = vrot.slane %v1548, 5
        %v1675 = vsel %vm1626, %v1673, %v1674
        %v1676 = vrot.slane %v1549, 5
        %v1677 = vrot.slane %v1676, 4
        %v1678 = vrot.slane %v1550, 5
        %v1679 = vsel %vm1626, %v1677, %v1678
        %v1680 = vrot.slane %v1678, 4
        %v1681 = vrot.slane %v1551, 5
        %v1682 = vsel %vm1626, %v1680, %v1681
        %v1683 = vrot.slane %v1552, 5
        %v1684 = vrot.slane %v1683, 4
        %v1685 = vrot.slane %v1553, 5
        %v1686 = vsel %vm1626, %v1684, %v1685
        %v1687 = vrot.slane %v1685, 4
        %v1688 = vrot.slane %v1554, 5
        %v1689 = vsel %vm1626, %v1687, %v1688
        %v1690 = vrot.slane %v1555, 5
        %v1691 = vrot.slane %v1690, 4
        %v1692 = vrot.slane %v1556, 5
        %v1693 = vsel %vm1626, %v1691, %v1692
        %v1694 = vrot.slane %v1692, 4
        %v1695 = vrot.slane %v1557, 5
        %v1696 = vsel %vm1626, %v1694, %v1695
        %v1697 = vrot.slane %v1558, 5
        %v1698 = vrot.slane %v1697, 4
        %v1699 = vrot.slane %v1559, 5
        %v1700 = vsel %vm1626, %v1698, %v1699
        %v1701 = vrot.slane %v1699, 4
        %v1702 = vrot.slane %v1560, 5
        %v1703 = vsel %vm1626, %v1701, %v1702
        %v1704 = vrot.slane %v1561, 5
        %v1705 = vrot.slane %v1704, 4
        %v1706 = vrot.slane %v1562, 5
        %v1707 = vsel %vm1626, %v1705, %v1706
        %v1708 = vrot.slane %v1706, 4
        %v1709 = vrot.slane %v1563, 5
        %v1710 = vsel %vm1626, %v1708, %v1709
        %v1711 = vrot.slane %v1564, 5
        %v1712 = vrot.slane %v1711, 4
        %v1713 = vrot.slane %v1565, 5
        %v1714 = vsel %vm1626, %v1712, %v1713
        %v1715 = vrot.slane %v1713, 4
        %v1716 = vrot.slane %v1566, 5
        %v1717 = vsel %vm1626, %v1715, %v1716
        %v1718 = vrot.slane %v1567, 5
        %v1719 = vrot.slane %v1718, 4
        %v1720 = vrot.slane %v1568, 5
        %v1721 = vsel %vm1626, %v1719, %v1720
        %v1722 = vrot.slane %v1720, 4
        %v1723 = vrot.slane %v1569, 5
        %v1724 = vsel %vm1626, %v1722, %v1723
        %v1725 = vrot.slane %v1570, 5
        %v1726 = vrot.slane %v1725, 4
        %v1727 = vrot.slane %v1571, 5
        %v1728 = vsel %vm1626, %v1726, %v1727
        %v1729 = vrot.slane %v1727, 4
        %v1730 = vrot.slane %v1572, 5
        %v1731 = vsel %vm1626, %v1729, %v1730
        %v1732 = vrot.slane %v1573, 5
        %v1733 = vrot.slane %v1732, 4
        %v1734 = vrot.slane %v1574, 5
        %v1735 = vsel %vm1626, %v1733, %v1734
        %v1736 = vrot.slane %v1734, 4
        %v1737 = vrot.slane %v1575, 5
        %v1738 = vsel %vm1626, %v1736, %v1737
        %v1739 = vld [vmem:[#allocation2] sm:$0xff]
        %v1740 = vld [vmem:[#allocation2 + $0x8] sm:$0xff]
        %v1741 = vld [vmem:[#allocation2 + $0x10] sm:$0xff]
        %v1742 = vld [vmem:[#allocation2 + $0x18] sm:$0xff]
        %v1743 = vld [vmem:[#allocation2 + $0x20] sm:$0xff]
        %v1744 = vld [vmem:[#allocation2 + $0x28] sm:$0xff]
        %v1745 = vld [vmem:[#allocation2 + $0x30] sm:$0xff]
        %v1746 = vld [vmem:[#allocation2 + $0x38] sm:$0xff]
        %v1747 = vld [vmem:[#allocation2 + $0x40] sm:$0xff]
        %v1748 = vld [vmem:[#allocation2 + $0x48] sm:$0xff]
        %v1749 = vld [vmem:[#allocation2 + $0x50] sm:$0xff]
        %v1750 = vld [vmem:[#allocation2 + $0x58] sm:$0xff]
        %v1751 = vld [vmem:[#allocation2 + $0x60] sm:$0xff]
        %v1752 = vld [vmem:[#allocation2 + $0x68] sm:$0xff]
        %v1753 = vld [vmem:[#allocation2 + $0x70] sm:$0xff]
        %v1754 = vld [vmem:[#allocation2 + $0x78] sm:$0xff]
        %v1755 = vld [vmem:[#allocation2 + $0x80] sm:$0xff]
        %v1756 = vld [vmem:[#allocation2 + $0x88] sm:$0xff]
        %v1757 = vld [vmem:[#allocation2 + $0x90] sm:$0xff]
        %v1758 = vld [vmem:[#allocation2 + $0x98] sm:$0xff]
        %v1759 = vld [vmem:[#allocation2 + $0xa0] sm:$0xff]
        %v1760 = vld [vmem:[#allocation2 + $0xa8] sm:$0xff]
        %v1761 = vld [vmem:[#allocation2 + $0xb0] sm:$0xff]
        %v1762 = vld [vmem:[#allocation2 + $0xb8] sm:$0xff]
        %v1763 = vld [vmem:[#allocation2 + $0xc0] sm:$0xff]
        %v1764 = vld [vmem:[#allocation2 + $0xc8] sm:$0xff]
        %v1765 = vld [vmem:[#allocation2 + $0xd0] sm:$0xff]
        %v1766 = vld [vmem:[#allocation2 + $0xd8] sm:$0xff]
        %v1767 = vld [vmem:[#allocation2 + $0xe0] sm:$0xff]
        %v1768 = vld [vmem:[#allocation2 + $0xe8] sm:$0xff]
        %v1769 = vld [vmem:[#allocation2 + $0xf0] sm:$0xff]
        %v1770 = vld [vmem:[#allocation2 + $0xf8] sm:$0xff]
        %s1771 = scalar_lea.vmem %s240, 8 [#allocation6]
        %v1772 = vld [vmem:[%s1771] sm:$0xf]
        %v1773 = vunpack.c.l.b16 %v1630
        %v1774 = vunpack.c.l.b16 %v1633
        %v1775 = vunpack.c.l.b16 %v1637
        %v1776 = vunpack.c.l.b16 %v1640
        %v1777 = vunpack.c.l.b16 %v1644
        %v1778 = vunpack.c.l.b16 %v1647
        %v1779 = vunpack.c.l.b16 %v1651
        %v1780 = vunpack.c.l.b16 %v1654
        %v1781 = vunpack.c.l.b16 %v1658
        %v1782 = vunpack.c.l.b16 %v1661
        %v1783 = vunpack.c.l.b16 %v1665
        %v1784 = vunpack.c.l.b16 %v1668
        %v1785 = vunpack.c.l.b16 %v1672
        %v1786 = vunpack.c.l.b16 %v1675
        %v1787 = vunpack.c.l.b16 %v1679
        %v1788 = vunpack.c.l.b16 %v1682
        %v1789 = vunpack.c.l.b16 %v1686
        %v1790 = vunpack.c.l.b16 %v1689
        %v1791 = vunpack.c.l.b16 %v1693
        %v1792 = vunpack.c.l.b16 %v1696
        %v1793 = vunpack.c.l.b16 %v1700
        %v1794 = vunpack.c.l.b16 %v1703
        %v1795 = vunpack.c.l.b16 %v1707
        %v1796 = vunpack.c.l.b16 %v1710
        %v1797 = vunpack.c.l.b16 %v1714
        %v1798 = vunpack.c.l.b16 %v1717
        %v1799 = vunpack.c.l.b16 %v1721
        %v1800 = vunpack.c.l.b16 %v1724
        %v1801 = vunpack.c.l.b16 %v1728
        %v1802 = vunpack.c.l.b16 %v1731
        %v1803 = vunpack.c.l.b16 %v1735
        %v1804 = vunpack.c.l.b16 %v1738
        %v1805 = vpack.c.b16 %v1774, %v1773
        %v1806 = vpack.c.b16 %v1776, %v1775
        %v1807 = vpack.c.b16 %v1778, %v1777
        %v1808 = vpack.c.b16 %v1780, %v1779
        %v1809 = vpack.c.b16 %v1782, %v1781
        %v1810 = vpack.c.b16 %v1784, %v1783
        %v1811 = vpack.c.b16 %v1786, %v1785
        %v1812 = vpack.c.b16 %v1788, %v1787
        %v1813 = vpack.c.b16 %v1790, %v1789
        %v1814 = vpack.c.b16 %v1792, %v1791
        %v1815 = vpack.c.b16 %v1794, %v1793
        %v1816 = vpack.c.b16 %v1796, %v1795
        %v1817 = vpack.c.b16 %v1798, %v1797
        %v1818 = vpack.c.b16 %v1800, %v1799
        %v1819 = vpack.c.b16 %v1802, %v1801
        %v1820 = vpack.c.b16 %v1804, %v1803
        %v1822 = vsel %vm457, %v1805, 0
        %v1825 = vsel %vm457, %v1806, 0
        %v1828 = vsel %vm457, %v1807, 0
        %v1831 = vsel %vm457, %v1808, 0
        %v1834 = vsel %vm457, %v1809, 0
        %v1837 = vsel %vm457, %v1810, 0
        %v1840 = vsel %vm457, %v1811, 0
        %v1843 = vsel %vm457, %v1812, 0
        %v1846 = vsel %vm457, %v1813, 0
        %v1849 = vsel %vm457, %v1814, 0
        %v1852 = vsel %vm457, %v1815, 0
        %v1855 = vsel %vm457, %v1816, 0
        %v1858 = vsel %vm457, %v1817, 0
        %v1861 = vsel %vm457, %v1818, 0
        %v1864 = vsel %vm457, %v1819, 0
        %v1867 = vsel %vm457, %v1820, 0
        %v1870 = vsel %vm506, %v1772, 0
        %1872 = vmatprep.subr.bf16.mxu0 0
        %1873 = vmatpush1.bf16.msra.mxu0 %v1870
        %1874 = vmatprep.subr.bf16.mxu0 0
        %1875 = vmatpush1.bf16.msra.mxu0 0
        %1876 = vmatprep.subr.bf16.mxu0 0
        %1877 = vmatpush1.bf16.msra.mxu0 0
        %1878 = vmatprep.subr.bf16.mxu0 0
        %1879 = vmatpush1.bf16.msra.mxu0 0
        %1880 = vmatprep.subr.bf16.mxu0 0
        %1881 = vmatpush1.bf16.msra.mxu0 0
        %1882 = vmatprep.subr.bf16.mxu0 0
        %1883 = vmatpush1.bf16.msra.mxu0 0
        %1884 = vmatprep.subr.bf16.mxu0 0
        %1885 = vmatpush1.bf16.msra.mxu0 0
        %1886 = vmatprep.subr.bf16.mxu0 0
        %1887 = vmatpush1.bf16.msra.mxu0 0
        %1888 = vmatprep.subr.bf16.mxu0 0
        %1889 = vmatpush1.bf16.msra.mxu0 0
        %1890 = vmatprep.subr.bf16.mxu0 0
        %1891 = vmatpush1.bf16.msra.mxu0 0
        %1892 = vmatprep.subr.bf16.mxu0 0
        %1893 = vmatpush1.bf16.msra.mxu0 0
        %1894 = vmatprep.subr.bf16.mxu0 0
        %1895 = vmatpush1.bf16.msra.mxu0 0
        %1896 = vmatprep.subr.bf16.mxu0 0
        %1897 = vmatpush1.bf16.msra.mxu0 0
        %1898 = vmatprep.subr.bf16.mxu0 0
        %1899 = vmatpush1.bf16.msra.mxu0 0
        %1900 = vmatprep.subr.bf16.mxu0 0
        %1901 = vmatpush1.bf16.msra.mxu0 0
        %1902 = vmatprep.subr.bf16.mxu0 0
        %1903 = vmatpush1.bf16.msra.mxu0 0
        %1904 = vmatprep.mubr.bf16.mxu0 0
        %1905 = vmatmul.mubr.bf16.gmra.mrb[0].mxu0 %v1822
        %v1906 = vpop.f32.mrb[0].mxu0
        %v1907 = vadd.f32 0.0, %v1906
        %v1908 = vpop.f32.mrb[0].mxu0
        %v1909 = vpop.f32.mrb[0].mxu0
        %v1910 = vadd.f32 0.0, %v1909
        %v1911 = vpop.f32.mrb[0].mxu0
        %1912 = vmatprep.mubr.bf16.mxu0 0
        %1913 = vmatmul.mubr.bf16.gmra.mrb[0].mxu0 %v1825
        %v1914 = vpop.f32.mrb[0].mxu0
        %v1915 = vadd.f32 0.0, %v1914
        %v1916 = vpop.f32.mrb[0].mxu0
        %v1917 = vpop.f32.mrb[0].mxu0
        %v1918 = vadd.f32 0.0, %v1917
        %v1919 = vpop.f32.mrb[0].mxu0
        %1920 = vmatprep.mubr.bf16.mxu0 0
        %1921 = vmatmul.mubr.bf16.gmra.mrb[0].mxu0 %v1828
        %v1922 = vpop.f32.mrb[0].mxu0
        %v1923 = vadd.f32 0.0, %v1922
        %v1924 = vpop.f32.mrb[0].mxu0
        %v1925 = vpop.f32.mrb[0].mxu0
        %v1926 = vadd.f32 0.0, %v1925
        %v1927 = vpop.f32.mrb[0].mxu0
        %1928 = vmatprep.mubr.bf16.mxu0 0
        %1929 = vmatmul.mubr.bf16.gmra.mrb[0].mxu0 %v1831
        %v1930 = vpop.f32.mrb[0].mxu0
        %v1931 = vadd.f32 0.0, %v1930
        %v1932 = vpop.f32.mrb[0].mxu0
        %v1933 = vpop.f32.mrb[0].mxu0
        %v1934 = vadd.f32 0.0, %v1933
        %v1935 = vpop.f32.mrb[0].mxu0
        %1936 = vmatprep.mubr.bf16.mxu0 0
        %1937 = vmatmul.mubr.bf16.gmra.mrb[0].mxu0 %v1834
        %v1938 = vpop.f32.mrb[0].mxu0
        %v1939 = vadd.f32 0.0, %v1938
        %v1940 = vpop.f32.mrb[0].mxu0
        %v1941 = vpop.f32.mrb[0].mxu0
        %v1942 = vadd.f32 0.0, %v1941
        %v1943 = vpop.f32.mrb[0].mxu0
        %1944 = vmatprep.mubr.bf16.mxu0 0
        %1945 = vmatmul.mubr.bf16.gmra.mrb[0].mxu0 %v1837
        %v1946 = vpop.f32.mrb[0].mxu0
        %v1947 = vadd.f32 0.0, %v1946
        %v1948 = vpop.f32.mrb[0].mxu0
        %v1949 = vpop.f32.mrb[0].mxu0
        %v1950 = vadd.f32 0.0, %v1949
        %v1951 = vpop.f32.mrb[0].mxu0
        %1952 = vmatprep.mubr.bf16.mxu0 0
        %1953 = vmatmul.mubr.bf16.gmra.mrb[0].mxu0 %v1840
        %v1954 = vpop.f32.mrb[0].mxu0
        %v1955 = vadd.f32 0.0, %v1954
        %v1956 = vpop.f32.mrb[0].mxu0
        %v1957 = vpop.f32.mrb[0].mxu0
        %v1958 = vadd.f32 0.0, %v1957
        %v1959 = vpop.f32.mrb[0].mxu0
        %1960 = vmatprep.mubr.bf16.mxu0 0
        %1961 = vmatmul.mubr.bf16.gmra.mrb[0].mxu0 %v1843
        %v1962 = vpop.f32.mrb[0].mxu0
        %v1963 = vadd.f32 0.0, %v1962
        %v1964 = vpop.f32.mrb[0].mxu0
        %v1965 = vpop.f32.mrb[0].mxu0
        %v1966 = vadd.f32 0.0, %v1965
        %v1967 = vpop.f32.mrb[0].mxu0
        %1968 = vmatprep.mubr.bf16.mxu0 0
        %1969 = vmatmul.mubr.bf16.gmra.mrb[0].mxu0 %v1846
        %v1970 = vpop.f32.mrb[0].mxu0
        %v1971 = vadd.f32 0.0, %v1970
        %v1972 = vpop.f32.mrb[0].mxu0
        %v1973 = vpop.f32.mrb[0].mxu0
        %v1974 = vadd.f32 0.0, %v1973
        %v1975 = vpop.f32.mrb[0].mxu0
        %1976 = vmatprep.mubr.bf16.mxu0 0
        %1977 = vmatmul.mubr.bf16.gmra.mrb[0].mxu0 %v1849
        %v1978 = vpop.f32.mrb[0].mxu0
        %v1979 = vadd.f32 0.0, %v1978
        %v1980 = vpop.f32.mrb[0].mxu0
        %v1981 = vpop.f32.mrb[0].mxu0
        %v1982 = vadd.f32 0.0, %v1981
        %v1983 = vpop.f32.mrb[0].mxu0
        %1984 = vmatprep.mubr.bf16.mxu0 0
        %1985 = vmatmul.mubr.bf16.gmra.mrb[0].mxu0 %v1852
        %v1986 = vpop.f32.mrb[0].mxu0
        %v1987 = vadd.f32 0.0, %v1986
        %v1988 = vpop.f32.mrb[0].mxu0
        %v1989 = vpop.f32.mrb[0].mxu0
        %v1990 = vadd.f32 0.0, %v1989
        %v1991 = vpop.f32.mrb[0].mxu0
        %1992 = vmatprep.mubr.bf16.mxu0 0
        %1993 = vmatmul.mubr.bf16.gmra.mrb[0].mxu0 %v1855
        %v1994 = vpop.f32.mrb[0].mxu0
        %v1995 = vadd.f32 0.0, %v1994
        %v1996 = vpop.f32.mrb[0].mxu0
        %v1997 = vpop.f32.mrb[0].mxu0
        %v1998 = vadd.f32 0.0, %v1997
        %v1999 = vpop.f32.mrb[0].mxu0
        %2000 = vmatprep.mubr.bf16.mxu0 0
        %2001 = vmatmul.mubr.bf16.gmra.mrb[0].mxu0 %v1858
        %v2002 = vpop.f32.mrb[0].mxu0
        %v2003 = vadd.f32 0.0, %v2002
        %v2004 = vpop.f32.mrb[0].mxu0
        %v2005 = vpop.f32.mrb[0].mxu0
        %v2006 = vadd.f32 0.0, %v2005
        %v2007 = vpop.f32.mrb[0].mxu0
        %2008 = vmatprep.mubr.bf16.mxu0 0
        %2009 = vmatmul.mubr.bf16.gmra.mrb[0].mxu0 %v1861
        %v2010 = vpop.f32.mrb[0].mxu0
        %v2011 = vadd.f32 0.0, %v2010
        %v2012 = vpop.f32.mrb[0].mxu0
        %v2013 = vpop.f32.mrb[0].mxu0
        %v2014 = vadd.f32 0.0, %v2013
        %v2015 = vpop.f32.mrb[0].mxu0
        %2016 = vmatprep.mubr.bf16.mxu0 0
        %2017 = vmatmul.mubr.bf16.gmra.mrb[0].mxu0 %v1864
        %v2018 = vpop.f32.mrb[0].mxu0
        %v2019 = vadd.f32 0.0, %v2018
        %v2020 = vpop.f32.mrb[0].mxu0
        %v2021 = vpop.f32.mrb[0].mxu0
        %v2022 = vadd.f32 0.0, %v2021
        %v2023 = vpop.f32.mrb[0].mxu0
        %2024 = vmatprep.mubr.bf16.mxu0 0
        %2025 = vmatmul.mubr.bf16.gmra.mrb[0].mxu0 %v1867
        %v2026 = vpop.f32.mrb[0].mxu0
        %v2027 = vadd.f32 0.0, %v2026
        %v2028 = vpop.f32.mrb[0].mxu0
        %v2029 = vpop.f32.mrb[0].mxu0
        %v2030 = vadd.f32 0.0, %v2029
        %v2031 = vpop.f32.mrb[0].mxu0
        %2032 = vdwg.mxu0
        %v2033 = vadd.f32 %v1739, %v1907
        %v2034 = vadd.f32 %v1740, %v1910
        %v2035 = vadd.f32 %v1741, %v1915
        %v2036 = vadd.f32 %v1742, %v1918
        %v2037 = vadd.f32 %v1743, %v1923
        %v2038 = vadd.f32 %v1744, %v1926
        %v2039 = vadd.f32 %v1745, %v1931
        %v2040 = vadd.f32 %v1746, %v1934
        %v2041 = vadd.f32 %v1747, %v1939
        %v2042 = vadd.f32 %v1748, %v1942
        %v2043 = vadd.f32 %v1749, %v1947
        %v2044 = vadd.f32 %v1750, %v1950
        %v2045 = vadd.f32 %v1751, %v1955
        %v2046 = vadd.f32 %v1752, %v1958
        %v2047 = vadd.f32 %v1753, %v1963
        %v2048 = vadd.f32 %v1754, %v1966
        %v2049 = vadd.f32 %v1755, %v1971
        %v2050 = vadd.f32 %v1756, %v1974
        %v2051 = vadd.f32 %v1757, %v1979
        %v2052 = vadd.f32 %v1758, %v1982
        %v2053 = vadd.f32 %v1759, %v1987
        %v2054 = vadd.f32 %v1760, %v1990
        %v2055 = vadd.f32 %v1761, %v1995
        %v2056 = vadd.f32 %v1762, %v1998
        %v2057 = vadd.f32 %v1763, %v2003
        %v2058 = vadd.f32 %v1764, %v2006
        %v2059 = vadd.f32 %v1765, %v2011
        %v2060 = vadd.f32 %v1766, %v2014
        %v2061 = vadd.f32 %v1767, %v2019
        %v2062 = vadd.f32 %v1768, %v2022
        %v2063 = vadd.f32 %v1769, %v2027
        %v2064 = vadd.f32 %v1770, %v2030
        %2065 = vst [vmem:[#allocation2] sm:$0xff] %v2033
        %2066 = vst [vmem:[#allocation2 + $0x8] sm:$0xff] %v2034
        %2067 = vst [vmem:[#allocation2 + $0x10] sm:$0xff] %v2035
        %2068 = vst [vmem:[#allocation2 + $0x18] sm:$0xff] %v2036
        %2069 = vst [vmem:[#allocation2 + $0x20] sm:$0xff] %v2037
        %2070 = vst [vmem:[#allocation2 + $0x28] sm:$0xff] %v2038
        %2071 = vst [vmem:[#allocation2 + $0x30] sm:$0xff] %v2039
        %2072 = vst [vmem:[#allocation2 + $0x38] sm:$0xff] %v2040
        %2073 = vst [vmem:[#allocation2 + $0x40] sm:$0xff] %v2041
        %2074 = vst [vmem:[#allocation2 + $0x48] sm:$0xff] %v2042
        %2075 = vst [vmem:[#allocation2 + $0x50] sm:$0xff] %v2043
        %2076 = vst [vmem:[#allocation2 + $0x58] sm:$0xff] %v2044
        %2077 = vst [vmem:[#allocation2 + $0x60] sm:$0xff] %v2045
        %2078 = vst [vmem:[#allocation2 + $0x68] sm:$0xff] %v2046
        %2079 = vst [vmem:[#allocation2 + $0x70] sm:$0xff] %v2047
        %2080 = vst [vmem:[#allocation2 + $0x78] sm:$0xff] %v2048
        %2081 = vst [vmem:[#allocation2 + $0x80] sm:$0xff] %v2049
        %2082 = vst [vmem:[#allocation2 + $0x88] sm:$0xff] %v2050
        %2083 = vst [vmem:[#allocation2 + $0x90] sm:$0xff] %v2051
        %2084 = vst [vmem:[#allocation2 + $0x98] sm:$0xff] %v2052
        %2085 = vst [vmem:[#allocation2 + $0xa0] sm:$0xff] %v2053
        %2086 = vst [vmem:[#allocation2 + $0xa8] sm:$0xff] %v2054
        %2087 = vst [vmem:[#allocation2 + $0xb0] sm:$0xff] %v2055
        %2088 = vst [vmem:[#allocation2 + $0xb8] sm:$0xff] %v2056
        %2089 = vst [vmem:[#allocation2 + $0xc0] sm:$0xff] %v2057
        %2090 = vst [vmem:[#allocation2 + $0xc8] sm:$0xff] %v2058
        %2091 = vst [vmem:[#allocation2 + $0xd0] sm:$0xff] %v2059
        %2092 = vst [vmem:[#allocation2 + $0xd8] sm:$0xff] %v2060
        %2093 = vst [vmem:[#allocation2 + $0xe0] sm:$0xff] %v2061
        %2094 = vst [vmem:[#allocation2 + $0xe8] sm:$0xff] %v2062
        %2095 = vst [vmem:[#allocation2 + $0xf0] sm:$0xff] %v2063
        %2096 = vst [vmem:[#allocation2 + $0xf8] sm:$0xff] %v2064
        %p2097 = scmp.eq.s32.totalorder %s30, 2
        // Predicated region
        $region49: #{tpu_custom_call.1} parent=31 // pred_check
          %p2098 = pneg %p2097
        $region50: #{tpu_custom_call.1} parent=31 // pred_check_branch
          %2100 = sbr.rel (%p2098) target = $region52
        $region51: #{tpu_custom_call.1} parent=31 // pred_region
          %v2101 = vld [vmem:[#allocation2] sm:$0xff]
          %v2102 = vld [vmem:[#allocation2 + $0x8] sm:$0xff]
          %v2103 = vld [vmem:[#allocation2 + $0x10] sm:$0xff]
          %v2104 = vld [vmem:[#allocation2 + $0x18] sm:$0xff]
          %v2105 = vld [vmem:[#allocation2 + $0x20] sm:$0xff]
          %v2106 = vld [vmem:[#allocation2 + $0x28] sm:$0xff]
          %v2107 = vld [vmem:[#allocation2 + $0x30] sm:$0xff]
          %v2108 = vld [vmem:[#allocation2 + $0x38] sm:$0xff]
          %v2109 = vld [vmem:[#allocation2 + $0x40] sm:$0xff]
          %v2110 = vld [vmem:[#allocation2 + $0x48] sm:$0xff]
          %v2111 = vld [vmem:[#allocation2 + $0x50] sm:$0xff]
          %v2112 = vld [vmem:[#allocation2 + $0x58] sm:$0xff]
          %v2113 = vld [vmem:[#allocation2 + $0x60] sm:$0xff]
          %v2114 = vld [vmem:[#allocation2 + $0x68] sm:$0xff]
          %v2115 = vld [vmem:[#allocation2 + $0x70] sm:$0xff]
          %v2116 = vld [vmem:[#allocation2 + $0x78] sm:$0xff]
          %v2117 = vld [vmem:[#allocation2 + $0x80] sm:$0xff]
          %v2118 = vld [vmem:[#allocation2 + $0x88] sm:$0xff]
          %v2119 = vld [vmem:[#allocation2 + $0x90] sm:$0xff]
          %v2120 = vld [vmem:[#allocation2 + $0x98] sm:$0xff]
          %v2121 = vld [vmem:[#allocation2 + $0xa0] sm:$0xff]
          %v2122 = vld [vmem:[#allocation2 + $0xa8] sm:$0xff]
          %v2123 = vld [vmem:[#allocation2 + $0xb0] sm:$0xff]
          %v2124 = vld [vmem:[#allocation2 + $0xb8] sm:$0xff]
          %v2125 = vld [vmem:[#allocation2 + $0xc0] sm:$0xff]
          %v2126 = vld [vmem:[#allocation2 + $0xc8] sm:$0xff]
          %v2127 = vld [vmem:[#allocation2 + $0xd0] sm:$0xff]
          %v2128 = vld [vmem:[#allocation2 + $0xd8] sm:$0xff]
          %v2129 = vld [vmem:[#allocation2 + $0xe0] sm:$0xff]
          %v2130 = vld [vmem:[#allocation2 + $0xe8] sm:$0xff]
          %v2131 = vld [vmem:[#allocation2 + $0xf0] sm:$0xff]
          %v2132 = vld [vmem:[#allocation2 + $0xf8] sm:$0xff]
          %v2133 = vld [vmem:[#allocation8] sm:$0x1]
          %v2135 = vlaneseq
          %v2136 = vshrl.u32 %v2135, 7
          %v2137 = vsub.s32 0, %v2136
          %v2138 = vrot.slane %v2133, %v2137
          %v2140 = vadd.f32 %v2101, %v2138
          %v2141 = vadd.f32 %v2102, %v2138
          %v2142 = vadd.f32 %v2103, %v2138
          %v2143 = vadd.f32 %v2104, %v2138
          %v2144 = vadd.f32 %v2105, %v2138
          %v2145 = vadd.f32 %v2106, %v2138
          %v2146 = vadd.f32 %v2107, %v2138
          %v2147 = vadd.f32 %v2108, %v2138
          %v2148 = vadd.f32 %v2109, %v2138
          %v2149 = vadd.f32 %v2110, %v2138
          %v2150 = vadd.f32 %v2111, %v2138
          %v2151 = vadd.f32 %v2112, %v2138
          %v2152 = vadd.f32 %v2113, %v2138
          %v2153 = vadd.f32 %v2114, %v2138
          %v2154 = vadd.f32 %v2115, %v2138
          %v2155 = vadd.f32 %v2116, %v2138
          %v2156 = vadd.f32 %v2117, %v2138
          %v2157 = vadd.f32 %v2118, %v2138
          %v2158 = vadd.f32 %v2119, %v2138
          %v2159 = vadd.f32 %v2120, %v2138
          %v2160 = vadd.f32 %v2121, %v2138
          %v2161 = vadd.f32 %v2122, %v2138
          %v2162 = vadd.f32 %v2123, %v2138
          %v2163 = vadd.f32 %v2124, %v2138
          %v2164 = vadd.f32 %v2125, %v2138
          %v2165 = vadd.f32 %v2126, %v2138
          %v2166 = vadd.f32 %v2127, %v2138
          %v2167 = vadd.f32 %v2128, %v2138
          %v2168 = vadd.f32 %v2129, %v2138
          %v2169 = vadd.f32 %v2130, %v2138
          %v2170 = vadd.f32 %v2131, %v2138
          %v2171 = vadd.f32 %v2132, %v2138
          %v2172 = vpack.c.bf16 %v2141, %v2140
          %v2173 = vpack.c.bf16 %v2143, %v2142
          %v2174 = vpack.c.bf16 %v2145, %v2144
          %v2175 = vpack.c.bf16 %v2147, %v2146
          %v2176 = vpack.c.bf16 %v2149, %v2148
          %v2177 = vpack.c.bf16 %v2151, %v2150
          %v2178 = vpack.c.bf16 %v2153, %v2152
          %v2179 = vpack.c.bf16 %v2155, %v2154
          %v2180 = vpack.c.bf16 %v2157, %v2156
          %v2181 = vpack.c.bf16 %v2159, %v2158
          %v2182 = vpack.c.bf16 %v2161, %v2160
          %v2183 = vpack.c.bf16 %v2163, %v2162
          %v2184 = vpack.c.bf16 %v2165, %v2164
          %v2185 = vpack.c.bf16 %v2167, %v2166
          %v2186 = vpack.c.bf16 %v2169, %v2168
          %v2187 = vpack.c.bf16 %v2171, %v2170
          %v2204 = vunpack.c.l.b16 %v2172
          %v2205 = vunpack.c.h.b16 %v2172
          %v2206 = vunpack.c.l.b16 %v2173
          %v2207 = vunpack.c.h.b16 %v2173
          %v2208 = vunpack.c.l.b16 %v2174
          %v2209 = vunpack.c.h.b16 %v2174
          %v2210 = vunpack.c.l.b16 %v2175
          %v2211 = vunpack.c.h.b16 %v2175
          %v2212 = vunpack.c.l.b16 %v2176
          %v2213 = vunpack.c.h.b16 %v2176
          %v2214 = vunpack.c.l.b16 %v2177
          %v2215 = vunpack.c.h.b16 %v2177
          %v2216 = vunpack.c.l.b16 %v2178
          %v2217 = vunpack.c.h.b16 %v2178
          %v2218 = vunpack.c.l.b16 %v2179
          %v2219 = vunpack.c.h.b16 %v2179
          %v2220 = vunpack.c.l.b16 %v2180
          %v2221 = vunpack.c.h.b16 %v2180
          %v2222 = vunpack.c.l.b16 %v2181
          %v2223 = vunpack.c.h.b16 %v2181
          %v2224 = vunpack.c.l.b16 %v2182
          %v2225 = vunpack.c.h.b16 %v2182
          %v2226 = vunpack.c.l.b16 %v2183
          %v2227 = vunpack.c.h.b16 %v2183
          %v2228 = vunpack.c.l.b16 %v2184
          %v2229 = vunpack.c.h.b16 %v2184
          %v2230 = vunpack.c.l.b16 %v2185
          %v2231 = vunpack.c.h.b16 %v2185
          %v2232 = vunpack.c.l.b16 %v2186
          %v2233 = vunpack.c.h.b16 %v2186
          %v2234 = vunpack.c.l.b16 %v2187
          %v2235 = vunpack.c.h.b16 %v2187
          %v2236 = vpack.c.b16 %v2204, %v2204
          %v2237 = vpack.c.b16 %v2205, %v2205
          %v2238 = vpack.c.b16 %v2206, %v2206
          %v2239 = vpack.c.b16 %v2207, %v2207
          %v2240 = vpack.c.b16 %v2208, %v2208
          %v2241 = vpack.c.b16 %v2209, %v2209
          %v2242 = vpack.c.b16 %v2210, %v2210
          %v2243 = vpack.c.b16 %v2211, %v2211
          %v2244 = vpack.c.b16 %v2212, %v2212
          %v2245 = vpack.c.b16 %v2213, %v2213
          %v2246 = vpack.c.b16 %v2214, %v2214
          %v2247 = vpack.c.b16 %v2215, %v2215
          %v2248 = vpack.c.b16 %v2216, %v2216
          %v2249 = vpack.c.b16 %v2217, %v2217
          %v2250 = vpack.c.b16 %v2218, %v2218
          %v2251 = vpack.c.b16 %v2219, %v2219
          %v2252 = vpack.c.b16 %v2220, %v2220
          %v2253 = vpack.c.b16 %v2221, %v2221
          %v2254 = vpack.c.b16 %v2222, %v2222
          %v2255 = vpack.c.b16 %v2223, %v2223
          %v2256 = vpack.c.b16 %v2224, %v2224
          %v2257 = vpack.c.b16 %v2225, %v2225
          %v2258 = vpack.c.b16 %v2226, %v2226
          %v2259 = vpack.c.b16 %v2227, %v2227
          %v2260 = vpack.c.b16 %v2228, %v2228
          %v2261 = vpack.c.b16 %v2229, %v2229
          %v2262 = vpack.c.b16 %v2230, %v2230
          %v2263 = vpack.c.b16 %v2231, %v2231
          %v2264 = vpack.c.b16 %v2232, %v2232
          %v2265 = vpack.c.b16 %v2233, %v2233
          %v2266 = vpack.c.b16 %v2234, %v2234
          %v2267 = vpack.c.b16 %v2235, %v2235
          %2300 = vst [vmem:[%s271] sm:$0xf] %v2236
          %2301 = vst [vmem:[%s271 + $0x4] sm:$0xf] %v2237
          %2302 = vst [vmem:[%s271 + $0x8] sm:$0xf] %v2238
          %2303 = vst [vmem:[%s271 + $0xc] sm:$0xf] %v2239
          %2304 = vst [vmem:[%s271 + $0x10] sm:$0xf] %v2240
          %2305 = vst [vmem:[%s271 + $0x14] sm:$0xf] %v2241
          %2306 = vst [vmem:[%s271 + $0x18] sm:$0xf] %v2242
          %2307 = vst [vmem:[%s271 + $0x1c] sm:$0xf] %v2243
          %2308 = vst [vmem:[%s271 + $0x20] sm:$0xf] %v2244
          %2309 = vst [vmem:[%s271 + $0x24] sm:$0xf] %v2245
          %2310 = vst [vmem:[%s271 + $0x28] sm:$0xf] %v2246
          %2311 = vst [vmem:[%s271 + $0x2c] sm:$0xf] %v2247
          %2312 = vst [vmem:[%s271 + $0x30] sm:$0xf] %v2248
          %2313 = vst [vmem:[%s271 + $0x34] sm:$0xf] %v2249
          %2314 = vst [vmem:[%s271 + $0x38] sm:$0xf] %v2250
          %2315 = vst [vmem:[%s271 + $0x3c] sm:$0xf] %v2251
          %2316 = vst [vmem:[%s271 + $0x40] sm:$0xf] %v2252
          %2317 = vst [vmem:[%s271 + $0x44] sm:$0xf] %v2253
          %2318 = vst [vmem:[%s271 + $0x48] sm:$0xf] %v2254
          %2319 = vst [vmem:[%s271 + $0x4c] sm:$0xf] %v2255
          %2320 = vst [vmem:[%s271 + $0x50] sm:$0xf] %v2256
          %2321 = vst [vmem:[%s271 + $0x54] sm:$0xf] %v2257
          %2322 = vst [vmem:[%s271 + $0x58] sm:$0xf] %v2258
          %2323 = vst [vmem:[%s271 + $0x5c] sm:$0xf] %v2259
          %2324 = vst [vmem:[%s271 + $0x60] sm:$0xf] %v2260
          %2325 = vst [vmem:[%s271 + $0x64] sm:$0xf] %v2261
          %2326 = vst [vmem:[%s271 + $0x68] sm:$0xf] %v2262
          %2327 = vst [vmem:[%s271 + $0x6c] sm:$0xf] %v2263
          %2328 = vst [vmem:[%s271 + $0x70] sm:$0xf] %v2264
          %2329 = vst [vmem:[%s271 + $0x74] sm:$0xf] %v2265
          %2330 = vst [vmem:[%s271 + $0x78] sm:$0xf] %v2266
          %2331 = vst [vmem:[%s271 + $0x7c] sm:$0xf] %v2267
        $region52: #{tpu_custom_call.1} parent=31 // pred_fallthru
          _
        %s2332 = sand.u32 %s132, 1
        %s2333 = scalar_lea.sflag [#allocation5], %s2332
        %s2334 = sand.u32 %s132, 1
        %s2335 = smul.addr %s2334, 128
        %s2336 = scalar_lea.vmem [#allocation9], %s2335
        // Predicated region
        $region53: #{tpu_custom_call.1} parent=31 // pred_check
          %p2337 = pneg %p142
        $region54: #{tpu_custom_call.1} parent=31 // pred_check_branch
          %2339 = sbr.rel (%p2337) target = $region56
        $region55: #{tpu_custom_call.1} parent=31 // pred_region
          %s2341 = ssub.s32 2048, 2048
          %2342 = vsyncadd %s2333, %s2341
          %s2343 = smul.addr %s28, 32
          %s2344 = sadd.s32 %s29, %s2343
          %s2345 = smul.addr %s2344, 64
          %s2346 = scalar_lea.hbm %s3, %s2345
          %s2347 = sshll.u32 %s2336, 4
          %s2348 = int_to_ptr.vmem [resolvable:$true] %s2347
          %2353 = dma.vmem_to_hbm [thread:$0]  %s2348, 2048, %s2346, %s2333, 64, 64, 4
        $region56: #{tpu_custom_call.1} parent=31 // pred_fallthru
          _
      $region32: #{tpu_custom_call.1} parent=5 // pred_fallthru
        _
      %p2354 = scmp.le.s32.totalorder 2, %s18
      // Predicated region
      $region57: #{tpu_custom_call.1} parent=5 // pred_check
        %p2355 = pneg %p2354
      $region58: #{tpu_custom_call.1} parent=5 // pred_check_branch
        %2357 = sbr.rel (%p2355) target = $region60
      $region59: #{tpu_custom_call.1} parent=5 // pred_region
        %s2358 = ssub.s32 %s18, 2
        // Predicated region
        $region61: #{tpu_custom_call.1} parent=59 // pred_check
          %p2359 = pneg %p148
        $region62: #{tpu_custom_call.1} parent=59 // pred_check_branch
          %2361 = sbr.rel (%p2359) target = $region64
        $region63: #{tpu_custom_call.1} parent=59 // pred_region
          %s2362 = sand.u32 %s133, 1
          %s2363 = scalar_lea.sflag [#allocation5], %s2362
          %s2364 = sand.u32 %s133, 1
          %s2365 = smul.addr %s2364, 128
          %s2366 = scalar_lea.vmem [#allocation9], %s2365
          %2367 = dma.done %s2363, 2048
        $region64: #{tpu_custom_call.1} parent=59 // pred_fallthru
          _
      $region60: #{tpu_custom_call.1} parent=5 // pred_fallthru
        _
    $region6: #{tpu_custom_call.1} parent=1 // loop_footer
      %s22 = sadd.s32 1, %s18
    $region7: #{tpu_custom_call.1} parent=1 // loop_footer_branch
      %17 = sbr.rel target = $region3
    $region8: #{tpu_custom_call.1} parent=1 // loop_exit
      _
    %2368 = vsyncpa [#allocation4], 1
    %s2369 = scalar_lea.sflag [#allocation4], 1
    %2370 = vsyncpa %s2369, 1
    %2371 = vsyncpa [#allocation7], 1
    %s2372 = scalar_lea.sflag [#allocation7], 1
    %2373 = vsyncpa %s2372, 1
    %2374 = vsyncpa [#allocation5], 1
    %s2375 = scalar_lea.sflag [#allocation5], 1
    %2376 = vsyncpa %s2375, 1

</llo_original>
